<compile_context>
chip_gen: v7x
topology: tpu7x:2x2x1
jax: 0.10.0
libtpu: 0.0.40
codegen_flags: <defaults>
</compile_context>

<pallas_src>
import functools

import jax
import jax.numpy as jnp
from jax.experimental import pallas as pl
from jax.experimental.pallas import tpu as pltpu

LANE = 128
NEG_BIG = -1e30   # "minus infinity" bias for padded logit columns (kept in f32)
MAX_TILE_N = 2048  # cap keeps double-buffered tiles + f32 intermediates < 16 MiB (v5e scoped default)


def _round_up(x, m):
    return ((x + m - 1) // m) * m


def _choose_tile_n(n):
    """Batch-tile size: >= 2 grid steps so v7x megacore can split the 'parallel'
    batch axis across its 2 TensorCores; as big as possible otherwise (fewer
    0.35 us grid steps, streaming DMA), capped for the tightest (v5e) VMEM."""
    return max(8, min(_round_up(pl.cdiv(n, 2), 8), MAX_TILE_N))


# ---------------------------------------------------------------------------
# Kernel
# ---------------------------------------------------------------------------
def mlp_kernel(x_ref, w1_ref, b1_ref, w2_ref, b2_ref, w3_ref, b3_ref, o_ref):
    """Fused 3-layer MLP forward for one batch tile (BN pre-folded into w/b)."""
    cdt = w1_ref.dtype  # MXU compute dtype; bias/ReLU/log_softmax epilogue is f32

    # x arrives f32; cast once per tile in VMEM (no extra HBM pass in the wrapper).
    x = x_ref[...].astype(cdt)

    # ---- layer 1: Linear (+folded BN) -> ReLU ----
    h = jnp.dot(x, w1_ref[...], preferred_element_type=jnp.float32) + b1_ref[...]
    h = jnp.maximum(h, 0.0)
    # TODO(synk): F.dropout(p=0.5, training=True) is stochastic; eval-mode
    # (identity) semantics are used here.

    # ---- layer 2: Linear (+folded BN) -> ReLU ----
    h = jnp.dot(h.astype(cdt), w2_ref[...],
                preferred_element_type=jnp.float32) + b2_ref[...]
    h = jnp.maximum(h, 0.0)

    # ---- output layer: Linear -> log_softmax(dim=-1) ----
    # Padded logit columns carry bias == NEG_BIG, so exp() underflows to 0 and
    # they do not contaminate the normalizer.
    z = jnp.dot(h.astype(cdt), w3_ref[...],
                preferred_element_type=jnp.float32) + b3_ref[...]
    m = jnp.max(z, axis=-1, keepdims=True)
    shifted = z - m
    lse = jnp.log(jnp.sum(jnp.exp(shifted), axis=-1, keepdims=True))
    # Store in the output dtype (bf16 on the bf16 path -> half the HBM writeback).
    o_ref[...] = (shifted - lse).astype(o_ref.dtype)


# ---------------------------------------------------------------------------
# Wrapper
# ---------------------------------------------------------------------------
@functools.partial(jax.jit, static_argnames=("out_c", "tile_n"))
def mlp_forward(x, params, *, out_c, tile_n=None):
    """x: [N, in_c] f32; params: prepared (folded/padded/cast) parameter dict.
    Returns f32 log-probs [N, out_c]."""
    w1, b1 = params["w1"], params["b1"]
    w2, b2 = params["w2"], params["b2"]
    w3, b3 = params["w3"], params["b3"]
    cdt = w1.dtype

    n, in_c = x.shape
    hid_p = w1.shape[1]
    out_p = w3.shape[1]

    if tile_n is None:
        tile_n = _choose_tile_n(n)

    n_pad = _round_up(n, tile_n)
    if n_pad != n:
        x = jnp.pad(x, ((0, n_pad - n), (0, 0)))

    grid = (n_pad // tile_n,)

    # Smallest lane-dense HBM output stream: bf16 when the MXU path is bf16
    # (log-prob precision is ample), f32 when computing in f32.
    out_dt = jnp.float32 if cdt == jnp.float32 else jnp.bfloat16

    def resident(shape):
        # Weights/biases: constant index_map -> stay resident in VMEM across
        # all batch tiles (no re-fetch). ~70 KB total; double-buffering them is
        # harmless even under v7x's tighter per-TC VMEM budget.
        return pl.BlockSpec(shape, lambda i: (0, 0))

    out = pl.pallas_call(
        mlp_kernel,
        out_shape=jax.ShapeDtypeStruct((n_pad, out_p), out_dt),
        grid=grid,
        in_specs=[
            pl.BlockSpec((tile_n, in_c), lambda i: (i, 0)),    # x (batch-tiled, f32)
            resident((in_c, hid_p)),  resident((1, hid_p)),    # w1, b1
            resident((hid_p, hid_p)), resident((1, hid_p)),    # w2, b2
            resident((hid_p, out_p)), resident((1, out_p)),    # w3, b3
        ],
        out_specs=pl.BlockSpec((tile_n, out_p), lambda i: (i, 0)),
        compiler_params=pltpu.CompilerParams(
            dimension_semantics=("parallel",)),                 # v7x megacore split
    )(x, w1, b1, w2, b2, w3, b3)

    # Slice off batch padding + padded logit columns; present f32 to callers.
    return out[:n, :out_c].astype(jnp.float32)


# ---------------------------------------------------------------------------
# Parameter preparation (offline folding + padding)
# ---------------------------------------------------------------------------
def fold_bn(gamma, beta, running_mean, running_var, eps=1e-5):
    """BatchNorm1d (eval) -> per-feature affine: y = x*scale + shift."""
    scale = gamma / jnp.sqrt(running_var + eps)
    shift = beta - running_mean * scale
    return scale, shift


def prepare_params(raw, compute_dtype=jnp.bfloat16):
    """Fold BN into the preceding Linear layers, pad feature dims to 128 lanes,
    cast weights to the MXU compute dtype (biases stay f32 for the epilogue)."""
    s1, t1 = fold_bn(raw["g1"], raw["be1"], raw["rm1"], raw["rv1"])
    s2, t2 = fold_bn(raw["g2"], raw["be2"], raw["rm2"], raw["rv2"])

    w1 = raw["w1"] * s1              # column-scale: (in, hid) * (1, hid)
    b1 = raw["b1"] * s1 + t1
    w2 = raw["w2"] * s2
    b2 = raw["b2"] * s2 + t2
    w3, b3 = raw["w3"], raw["b3"]

    in_c, hid_c = w1.shape
    out_c = w3.shape[1]
    hid_p = _round_up(hid_c, LANE)
    out_p = _round_up(out_c, LANE)

    w1 = jnp.pad(w1, ((0, 0), (0, hid_p - hid_c)))
    b1 = jnp.pad(b1, ((0, 0), (0, hid_p - hid_c)))
    w2 = jnp.pad(w2, ((0, hid_p - hid_c), (0, hid_p - hid_c)))
    b2 = jnp.pad(b2, ((0, 0), (0, hid_p - hid_c)))
    w3 = jnp.pad(w3, ((0, hid_p - hid_c), (0, out_p - out_c)))
    b3 = jnp.pad(b3, ((0, 0), (0, out_p - out_c)), constant_values=NEG_BIG)

    return dict(w1=w1.astype(compute_dtype), b1=b1.astype(jnp.float32),
                w2=w2.astype(compute_dtype), b2=b2.astype(jnp.float32),
                w3=w3.astype(compute_dtype), b3=b3.astype(jnp.float32))


def make_raw_params(key, in_c, hid_c, out_c):
    ks = jax.random.split(key, 12)

    def lin(kw, kb, fan_in, fan_out):
        bound = 1.0 / jnp.sqrt(fan_in)
        # torch Linear stores weight as [out, in]; here it is pre-transposed.
        w = jax.random.uniform(kw, (fan_in, fan_out), jnp.float32, -bound, bound)
        b = jax.random.uniform(kb, (1, fan_out), jnp.float32, -bound, bound)
        return w, b

    w1, b1 = lin(ks[0], ks[1], in_c, hid_c)
    w2, b2 = lin(ks[2], ks[3], hid_c, hid_c)
    w3, b3 = lin(ks[4], ks[5], hid_c, out_c)

    # Deterministic (non-trivial) BatchNorm running stats + affine params.
    g1 = 1.0 + 0.1 * jax.random.normal(ks[6], (1, hid_c), jnp.float32)
    be1 = 0.1 * jax.random.normal(ks[7], (1, hid_c), jnp.float32)
    rm1 = 0.1 * jax.random.normal(ks[8], (1, hid_c), jnp.float32)
    rv1 = 1.0 + 0.1 * jnp.abs(jax.random.normal(ks[9], (1, hid_c), jnp.float32))

    g2 = 1.0 + 0.1 * jax.random.normal(ks[10], (1, hid_c), jnp.float32)
    be2 = 0.1 * jax.random.normal(ks[11], (1, hid_c), jnp.float32)
    rm2 = jnp.zeros((1, hid_c), jnp.float32)
    rv2 = jnp.ones((1, hid_c), jnp.float32)

    return dict(w1=w1, b1=b1, w2=w2, b2=b2, w3=w3, b3=b3,
                g1=g1, be1=be1, rm1=rm1, rv1=rv1,
                g2=g2, be2=be2, rm2=rm2, rv2=rv2)


# ---------------------------------------------------------------------------
# References
# ---------------------------------------------------------------------------
def mlp_reference_folded(x, p, out_c):
    """Same math as the kernel (f32 epilogue / output), on prepared params."""
    cdt = p["w1"].dtype
    xc = x.astype(cdt)
    h = jnp.dot(xc, p["w1"], preferred_element_type=jnp.float32) + p["b1"]
    h = jnp.maximum(h, 0.0)
    h = jnp.dot(h.astype(cdt), p["w2"], preferred_element_type=jnp.float32) + p["b2"]
    h = jnp.maximum(h, 0.0)
    z = jnp.dot(h.astype(cdt), p["w3"], preferred_element_type=jnp.float32) + p["b3"]
    return jax.nn.log_softmax(z, axis=-1)[:, :out_c]


def mlp_reference_raw(x, raw, eps=1e-5):
    """Plain-JAX transcription of the PyTorch module in eval mode (f32)."""
    h = x @ raw["w1"] + raw["b1"]
    h = (h - raw["rm1"]) / jnp.sqrt(raw["rv1"] + eps) * raw["g1"] + raw["be1"]
    h = jnp.maximum(h, 0.0)
    h = h @ raw["w2"] + raw["b2"]
    h = (h - raw["rm2"]) / jnp.sqrt(raw["rv2"] + eps) * raw["g2"] + raw["be2"]
    h = jnp.maximum(h, 0.0)
    z = h @ raw["w3"] + raw["b3"]
    return jax.nn.log_softmax(z, axis=-1)


if __name__ == "__main__":
    # MLP(in_channels=16, hidden_channels=32, out_channels=8, num_layers=3, dropout=0.5)
    N, IN_C, HID_C, OUT_C = 500, 16, 32, 8    # N not a tile multiple: exercises padding

    key = jax.random.PRNGKey(0)
    kx, kp = jax.random.split(key)
    x = jax.random.normal(kx, (N, IN_C), jnp.float32)
    raw = make_raw_params(kp, IN_C, HID_C, OUT_C)

    # --- bf16 MXU path (v6e/v7x fast path; bf16 output stream, auto tile -> 2 tiles) ---
    p_bf16 = prepare_params(raw, jnp.bfloat16)
    out_bf16 = jax.block_until_ready(mlp_forward(x, p_bf16, out_c=OUT_C))
    ref_bf16 = mlp_reference_folded(x, p_bf16, OUT_C)
    assert out_bf16.shape == (N, OUT_C)
    assert jnp.allclose(out_bf16, ref_bf16, atol=5e-2, rtol=2e-2), \
        "bf16 kernel mismatch vs folded reference"

    # --- f32 MXU path (f32 output stream; tight numerical check of the kernel) ---
    p_f32 = prepare_params(raw, jnp.float32)
    out_f32 = jax.block_until_ready(mlp_forward(x, p_f32, out_c=OUT_C))
    ref_f32 = mlp_reference_folded(x, p_f32, OUT_C)
    assert jnp.allclose(out_f32, ref_f32, atol=1e-4, rtol=1e-4), \
        "f32 kernel mismatch vs folded reference"

    # --- explicit tile override path (exercises a different grid shape) ---
    out_f32_t = jax.block_until_ready(mlp_forward(x, p_f32, out_c=OUT_C, tile_n=128))
    assert jnp.allclose(out_f32_t, ref_f32, atol=1e-4, rtol=1e-4), \
        "f32 kernel (tile_n=128) mismatch vs folded reference"

    # --- semantic check vs the un-folded PyTorch-style math (looser: precision) ---
    ref_raw = mlp_reference_raw(x, raw)
    assert jnp.allclose(out_f32, ref_raw, atol=5e-2, rtol=1e-2), \
        "kernel mismatch vs raw (unfolded) reference"

    print("KERNEL_OK")
</pallas_src>

<mosaic_0001>
module attributes {stable_mosaic.version = 11 : i64} {
  func.func @mlp_kernel(%arg0: i32, %arg1: memref<256x16xf32, #tpu.memory_space<vmem>>, %arg2: memref<16x128xbf16, #tpu.memory_space<vmem>>, %arg3: memref<1x128xf32, #tpu.memory_space<vmem>>, %arg4: memref<128x128xbf16, #tpu.memory_space<vmem>>, %arg5: memref<1x128xf32, #tpu.memory_space<vmem>>, %arg6: memref<128x128xbf16, #tpu.memory_space<vmem>>, %arg7: memref<1x128xf32, #tpu.memory_space<vmem>>, %arg8: memref<256x128xbf16, #tpu.memory_space<vmem>>) attributes {dimension_semantics = [#tpu.dimension_semantics<parallel>], iteration_bounds = array<i64: 2>, scalar_prefetch = 0 : i64, scratch_operands = 0 : i64, tpu.core_type = #tpu.core_type<tc>, window_params = [{transform_indices = @transform_0, window_bounds = array<i64: 256, 16>}, {pipeline_mode = #tpu.pipeline_mode<synchronous>, transform_indices = @transform_1, window_bounds = array<i64: 16, 128>}, {pipeline_mode = #tpu.pipeline_mode<synchronous>, transform_indices = @transform_2, window_bounds = array<i64: 1, 128>}, {pipeline_mode = #tpu.pipeline_mode<synchronous>, transform_indices = @transform_3, window_bounds = array<i64: 128, 128>}, {pipeline_mode = #tpu.pipeline_mode<synchronous>, transform_indices = @transform_4, window_bounds = array<i64: 1, 128>}, {pipeline_mode = #tpu.pipeline_mode<synchronous>, transform_indices = @transform_5, window_bounds = array<i64: 128, 128>}, {pipeline_mode = #tpu.pipeline_mode<synchronous>, transform_indices = @transform_6, window_bounds = array<i64: 1, 128>}, {transform_indices = @transform_7, window_bounds = array<i64: 256, 128>}]} {
    %c0 = arith.constant 0 : index
    %c0_0 = arith.constant 0 : index
    %0 = vector.load %arg1[%c0, %c0_0] : memref<256x16xf32, #tpu.memory_space<vmem>>, vector<256x16xf32>
    %1 = arith.truncf %0 : vector<256x16xf32> to vector<256x16xbf16>
    %c0_1 = arith.constant 0 : index
    %c0_2 = arith.constant 0 : index
    %2 = vector.load %arg2[%c0_1, %c0_2] : memref<16x128xbf16, #tpu.memory_space<vmem>>, vector<16x128xbf16>
    %cst = arith.constant dense<0.000000e+00> : vector<256x128xf32>
    %3 = tpu.matmul %1, %2, %cst {dimension_numbers = #tpu.dot_dimension_numbers<[1], [0], [0], [1], [0, 0, 1, 1], [], []>} : vector<256x16xbf16>, vector<16x128xbf16>, vector<256x128xf32> -> vector<256x128xf32>
    %c0_3 = arith.constant 0 : index
    %c0_4 = arith.constant 0 : index
    %4 = vector.load %arg3[%c0_3, %c0_4] : memref<1x128xf32, #tpu.memory_space<vmem>>, vector<1x128xf32>
    %5 = vector.broadcast %4 : vector<1x128xf32> to vector<256x128xf32>
    %6 = arith.addf %3, %5 : vector<256x128xf32>
    %cst_5 = arith.constant 0.000000e+00 : f32
    %7 = vector.broadcast %cst_5 : f32 to vector<256x128xf32>
    %8 = arith.maximumf %6, %7 : vector<256x128xf32>
    %9 = arith.truncf %8 : vector<256x128xf32> to vector<256x128xbf16>
    %c0_6 = arith.constant 0 : index
    %c0_7 = arith.constant 0 : index
    %10 = vector.load %arg4[%c0_6, %c0_7] : memref<128x128xbf16, #tpu.memory_space<vmem>>, vector<128x128xbf16>
    %cst_8 = arith.constant dense<0.000000e+00> : vector<256x128xf32>
    %11 = tpu.matmul %9, %10, %cst_8 {dimension_numbers = #tpu.dot_dimension_numbers<[1], [0], [0], [1], [0, 0, 1, 1], [], []>} : vector<256x128xbf16>, vector<128x128xbf16>, vector<256x128xf32> -> vector<256x128xf32>
    %c0_9 = arith.constant 0 : index
    %c0_10 = arith.constant 0 : index
    %12 = vector.load %arg5[%c0_9, %c0_10] : memref<1x128xf32, #tpu.memory_space<vmem>>, vector<1x128xf32>
    %13 = vector.broadcast %12 : vector<1x128xf32> to vector<256x128xf32>
    %14 = arith.addf %11, %13 : vector<256x128xf32>
    %cst_11 = arith.constant 0.000000e+00 : f32
    %15 = vector.broadcast %cst_11 : f32 to vector<256x128xf32>
    %16 = arith.maximumf %14, %15 : vector<256x128xf32>
    %17 = arith.truncf %16 : vector<256x128xf32> to vector<256x128xbf16>
    %c0_12 = arith.constant 0 : index
    %c0_13 = arith.constant 0 : index
    %18 = vector.load %arg6[%c0_12, %c0_13] : memref<128x128xbf16, #tpu.memory_space<vmem>>, vector<128x128xbf16>
    %cst_14 = arith.constant dense<0.000000e+00> : vector<256x128xf32>
    %19 = tpu.matmul %17, %18, %cst_14 {dimension_numbers = #tpu.dot_dimension_numbers<[1], [0], [0], [1], [0, 0, 1, 1], [], []>} : vector<256x128xbf16>, vector<128x128xbf16>, vector<256x128xf32> -> vector<256x128xf32>
    %c0_15 = arith.constant 0 : index
    %c0_16 = arith.constant 0 : index
    %20 = vector.load %arg7[%c0_15, %c0_16] : memref<1x128xf32, #tpu.memory_space<vmem>>, vector<1x128xf32>
    %21 = vector.broadcast %20 : vector<1x128xf32> to vector<256x128xf32>
    %22 = arith.addf %19, %21 : vector<256x128xf32>
    %cst_17 = arith.constant dense<0xFF800000> : vector<256xf32>
    %23 = vector.multi_reduction <maximumf>, %22, %cst_17 [1] : vector<256x128xf32> to vector<256xf32>
    %24 = vector.shape_cast %23 : vector<256xf32> to vector<256x1xf32>
    %25 = vector.broadcast %24 : vector<256x1xf32> to vector<256x128xf32>
    %26 = arith.subf %22, %25 : vector<256x128xf32>
    %27 = math.exp %26 : vector<256x128xf32>
    %cst_18 = arith.constant dense<0.000000e+00> : vector<256xf32>
    %28 = vector.multi_reduction <add>, %27, %cst_18 [1] : vector<256x128xf32> to vector<256xf32>
    %29 = vector.shape_cast %28 : vector<256xf32> to vector<256x1xf32>
    %30 = math.log %29 : vector<256x1xf32>
    %31 = vector.broadcast %30 : vector<256x1xf32> to vector<256x128xf32>
    %32 = arith.subf %26, %31 : vector<256x128xf32>
    %33 = arith.truncf %32 : vector<256x128xf32> to vector<256x128xbf16>
    %c0_19 = arith.constant 0 : index
    %c0_20 = arith.constant 0 : index
    %34 = vector.load %arg8[%c0_19, %c0_20] : memref<256x128xbf16, #tpu.memory_space<vmem>>, vector<256x128xbf16>
    tpu.vector_store %arg8[%c0_19, %c0_20], %33 {strides = array<i32>} : memref<256x128xbf16, #tpu.memory_space<vmem>>, vector<256x128xbf16>,
    return
  }
  func.func @transform_0(%arg0: i32) -> (i32, i32) {
    %c0_i32 = arith.constant 0 : i32
    %c0_i32_0 = arith.constant 0 : i32
    return %arg0, %c0_i32 : i32, i32
  }
  func.func @transform_1(%arg0: i32) -> (i32, i32) {
    %c0_i32 = arith.constant 0 : i32
    %c0_i32_0 = arith.constant 0 : i32
    %c0_i32_1 = arith.constant 0 : i32
    return %c0_i32, %c0_i32_0 : i32, i32
  }
  func.func @transform_2(%arg0: i32) -> (i32, i32) {
    %c0_i32 = arith.constant 0 : i32
    %c0_i32_0 = arith.constant 0 : i32
    %c0_i32_1 = arith.constant 0 : i32
    return %c0_i32, %c0_i32_0 : i32, i32
  }
  func.func @transform_3(%arg0: i32) -> (i32, i32) {
    %c0_i32 = arith.constant 0 : i32
    %c0_i32_0 = arith.constant 0 : i32
    %c0_i32_1 = arith.constant 0 : i32
    return %c0_i32, %c0_i32_0 : i32, i32
  }
  func.func @transform_4(%arg0: i32) -> (i32, i32) {
    %c0_i32 = arith.constant 0 : i32
    %c0_i32_0 = arith.constant 0 : i32
    %c0_i32_1 = arith.constant 0 : i32
    return %c0_i32, %c0_i32_0 : i32, i32
  }
  func.func @transform_5(%arg0: i32) -> (i32, i32) {
    %c0_i32 = arith.constant 0 : i32
    %c0_i32_0 = arith.constant 0 : i32
    %c0_i32_1 = arith.constant 0 : i32
    return %c0_i32, %c0_i32_0 : i32, i32
  }
  func.func @transform_6(%arg0: i32) -> (i32, i32) {
    %c0_i32 = arith.constant 0 : i32
    %c0_i32_0 = arith.constant 0 : i32
    %c0_i32_1 = arith.constant 0 : i32
    return %c0_i32, %c0_i32_0 : i32, i32
  }
  func.func @transform_7(%arg0: i32) -> (i32, i32) {
    %c0_i32 = arith.constant 0 : i32
    %c0_i32_0 = arith.constant 0 : i32
    return %arg0, %c0_i32 : i32, i32
  }
}

</mosaic_0001>

<llo_original>
// kernel: mlp_forward.1
$region0: #{mlp_forward.1}
  #allocation0 [shape = 'u32[]', space=smem, size = 0x4, offset = 0x4, fixed_abs, tag = 'smem constant byte address 0x4 - core index']
  #allocation1 [shape = 'u32[144,128]{1,0:T(1,128)}', space=vmem, size = 0x12000, scoped, tag = 'internal scratch']
  %s0 = inlined_call_operand.vmem [shape: f32[512,16], index: 0, kind: input, shape index: {}]
  %s1 = inlined_call_operand.vmem [shape: bf16[16,128], index: 1, kind: input, shape index: {}]
  %s2 = inlined_call_operand.vmem [shape: f32[1,128], index: 2, kind: input, shape index: {}]
  %s3 = inlined_call_operand.vmem [shape: bf16[128,128], index: 3, kind: input, shape index: {}]
  %s4 = inlined_call_operand.vmem [shape: f32[1,128], index: 4, kind: input, shape index: {}]
  %s5 = inlined_call_operand.vmem [shape: bf16[128,128], index: 5, kind: input, shape index: {}]
  %s6 = inlined_call_operand.vmem [shape: f32[1,128], index: 6, kind: input, shape index: {}]
  %s7 = inlined_call_operand.vmem [shape: bf16[512,128], index: 7, kind: output, shape index: {}]
  %s8 = sld [smem:[#allocation0]]
  $region61: #{mlp_forward.1} parent=0
    _
  %s10 = ssub.s32 1, %s8
  %s11 = scalar_select 0, %s10, %s8
  loop: start=0, step=1, limit=4
  $region2: #{mlp_forward.1} parent=0 // loop_pre_header
    _
  $region3: #{mlp_forward.1} parent=0 // loop_header
    %s13 = sphi 0, %s17
    %p14 = scmp.ge.s32.totalorder %s13, 4
    %s23 = sphi 0, %s25
    %s26 = sphi 0, %s23
    %s27 = sphi 0, %s26
    %s43 = sphi 0, %s27
    %s47 = sphi 0, %s47
    %s49 = sphi 0, %s47
    %s50 = sphi 0, %s49
    %s64 = sphi 0, %s50
    %s68 = sphi 0, %s68
    %s70 = sphi 0, %s68
    %s71 = sphi 0, %s70
    %s85 = sphi 0, %s71
    %s89 = sphi 0, %s89
    %s91 = sphi 0, %s89
    %s92 = sphi 0, %s91
    %s106 = sphi 0, %s92
    %s110 = sphi 0, %s110
    %s112 = sphi 0, %s110
    %s113 = sphi 0, %s112
    %s127 = sphi 0, %s113
    %s131 = sphi 0, %s131
    %s133 = sphi 0, %s131
    %s134 = sphi 0, %s133
    %s148 = sphi 0, %s134
    %s152 = sphi 0, %s152
    %s154 = sphi 0, %s152
    %s155 = sphi 0, %s154
    %s169 = sphi 0, %s155
    %s175 = sphi 0, %s177
    %s178 = sphi 0, %s175
    %s179 = sphi 0, %s178
    %s195 = sphi 0, %s179
  $region4: #{mlp_forward.1} parent=0 // loop_header_branch
    %16 = sbr.rel (%p14) target = $region8
  $region5: #{mlp_forward.1} parent=0 // loop_body
    %s18 = ssub.s32 %s13, 1
    %s19 = ssub.s32 %s13, 2
    %s20 = sadd.s32 %s13, 1
    %s21 = ssub.s32 %s13, %s20
    %p22 = scmp.eq.s32.totalorder %s21, 0
    %s24 = sadd.s32 %s23, 1
    %s25 = scalar_select %p22, %s23, %s24
    %p28 = pneg %p22
    %p29 = scmp.eq.s32.totalorder %s13, 1
    %p30 = por %p28, %p29
    %p31 = scmp.ne.s32.totalorder %s23, %s26
    %p32 = scmp.eq.s32.totalorder %s13, 0
    %p33 = por %p31, %p32
    %p34 = scmp.ne.s32.totalorder %s23, %s26
    %p35 = scmp.eq.s32.totalorder %s18, 1
    %p36 = por %p34, %p35
    %p37 = scmp.ne.s32.totalorder %s26, %s27
    %p38 = scmp.eq.s32.totalorder %s18, 0
    %p39 = por %p37, %p38
    %p40 = scmp.ne.s32.totalorder %s26, %s27
    %p41 = scmp.eq.s32.totalorder %s19, 1
    %p42 = por %p40, %p41
    %p44 = scmp.ne.s32.totalorder %s27, %s43
    %p45 = scmp.eq.s32.totalorder %s19, 0
    %p46 = por %p44, %p45
    %s48 = sadd.s32 %s47, 1
    %p51 = scmp.eq.s32.totalorder %s13, 1
    %p52 = scmp.ne.s32.totalorder %s47, %s49
    %p53 = scmp.eq.s32.totalorder %s13, 0
    %p54 = por %p52, %p53
    %p55 = scmp.ne.s32.totalorder %s47, %s49
    %p56 = scmp.eq.s32.totalorder %s18, 1
    %p57 = por %p55, %p56
    %p58 = scmp.ne.s32.totalorder %s49, %s50
    %p59 = scmp.eq.s32.totalorder %s18, 0
    %p60 = por %p58, %p59
    %p61 = scmp.ne.s32.totalorder %s49, %s50
    %p62 = scmp.eq.s32.totalorder %s19, 1
    %p63 = por %p61, %p62
    %p65 = scmp.ne.s32.totalorder %s50, %s64
    %p66 = scmp.eq.s32.totalorder %s19, 0
    %p67 = por %p65, %p66
    %s69 = sadd.s32 %s68, 1
    %p72 = scmp.eq.s32.totalorder %s13, 1
    %p73 = scmp.ne.s32.totalorder %s68, %s70
    %p74 = scmp.eq.s32.totalorder %s13, 0
    %p75 = por %p73, %p74
    %p76 = scmp.ne.s32.totalorder %s68, %s70
    %p77 = scmp.eq.s32.totalorder %s18, 1
    %p78 = por %p76, %p77
    %p79 = scmp.ne.s32.totalorder %s70, %s71
    %p80 = scmp.eq.s32.totalorder %s18, 0
    %p81 = por %p79, %p80
    %p82 = scmp.ne.s32.totalorder %s70, %s71
    %p83 = scmp.eq.s32.totalorder %s19, 1
    %p84 = por %p82, %p83
    %p86 = scmp.ne.s32.totalorder %s71, %s85
    %p87 = scmp.eq.s32.totalorder %s19, 0
    %p88 = por %p86, %p87
    %s90 = sadd.s32 %s89, 1
    %p93 = scmp.eq.s32.totalorder %s13, 1
    %p94 = scmp.ne.s32.totalorder %s89, %s91
    %p95 = scmp.eq.s32.totalorder %s13, 0
    %p96 = por %p94, %p95
    %p97 = scmp.ne.s32.totalorder %s89, %s91
    %p98 = scmp.eq.s32.totalorder %s18, 1
    %p99 = por %p97, %p98
    %p100 = scmp.ne.s32.totalorder %s91, %s92
    %p101 = scmp.eq.s32.totalorder %s18, 0
    %p102 = por %p100, %p101
    %p103 = scmp.ne.s32.totalorder %s91, %s92
    %p104 = scmp.eq.s32.totalorder %s19, 1
    %p105 = por %p103, %p104
    %p107 = scmp.ne.s32.totalorder %s92, %s106
    %p108 = scmp.eq.s32.totalorder %s19, 0
    %p109 = por %p107, %p108
    %s111 = sadd.s32 %s110, 1
    %p114 = scmp.eq.s32.totalorder %s13, 1
    %p115 = scmp.ne.s32.totalorder %s110, %s112
    %p116 = scmp.eq.s32.totalorder %s13, 0
    %p117 = por %p115, %p116
    %p118 = scmp.ne.s32.totalorder %s110, %s112
    %p119 = scmp.eq.s32.totalorder %s18, 1
    %p120 = por %p118, %p119
    %p121 = scmp.ne.s32.totalorder %s112, %s113
    %p122 = scmp.eq.s32.totalorder %s18, 0
    %p123 = por %p121, %p122
    %p124 = scmp.ne.s32.totalorder %s112, %s113
    %p125 = scmp.eq.s32.totalorder %s19, 1
    %p126 = por %p124, %p125
    %p128 = scmp.ne.s32.totalorder %s113, %s127
    %p129 = scmp.eq.s32.totalorder %s19, 0
    %p130 = por %p128, %p129
    %s132 = sadd.s32 %s131, 1
    %p135 = scmp.eq.s32.totalorder %s13, 1
    %p136 = scmp.ne.s32.totalorder %s131, %s133
    %p137 = scmp.eq.s32.totalorder %s13, 0
    %p138 = por %p136, %p137
    %p139 = scmp.ne.s32.totalorder %s131, %s133
    %p140 = scmp.eq.s32.totalorder %s18, 1
    %p141 = por %p139, %p140
    %p142 = scmp.ne.s32.totalorder %s133, %s134
    %p143 = scmp.eq.s32.totalorder %s18, 0
    %p144 = por %p142, %p143
    %p145 = scmp.ne.s32.totalorder %s133, %s134
    %p146 = scmp.eq.s32.totalorder %s19, 1
    %p147 = por %p145, %p146
    %p149 = scmp.ne.s32.totalorder %s134, %s148
    %p150 = scmp.eq.s32.totalorder %s19, 0
    %p151 = por %p149, %p150
    %s153 = sadd.s32 %s152, 1
    %p156 = scmp.eq.s32.totalorder %s13, 1
    %p157 = scmp.ne.s32.totalorder %s152, %s154
    %p158 = scmp.eq.s32.totalorder %s13, 0
    %p159 = por %p157, %p158
    %p160 = scmp.ne.s32.totalorder %s152, %s154
    %p161 = scmp.eq.s32.totalorder %s18, 1
    %p162 = por %p160, %p161
    %p163 = scmp.ne.s32.totalorder %s154, %s155
    %p164 = scmp.eq.s32.totalorder %s18, 0
    %p165 = por %p163, %p164
    %p166 = scmp.ne.s32.totalorder %s154, %s155
    %p167 = scmp.eq.s32.totalorder %s19, 1
    %p168 = por %p166, %p167
    %p170 = scmp.ne.s32.totalorder %s155, %s169
    %p171 = scmp.eq.s32.totalorder %s19, 0
    %p172 = por %p170, %p171
    %s173 = ssub.s32 %s13, %s20
    %p174 = scmp.eq.s32.totalorder %s173, 0
    %s176 = sadd.s32 %s175, 1
    %s177 = scalar_select %p174, %s175, %s176
    %p180 = pneg %p174
    %p181 = scmp.eq.s32.totalorder %s13, 1
    %p182 = por %p180, %p181
    %p183 = scmp.ne.s32.totalorder %s175, %s178
    %p184 = scmp.eq.s32.totalorder %s13, 0
    %p185 = por %p183, %p184
    %p186 = scmp.ne.s32.totalorder %s175, %s178
    %p187 = scmp.eq.s32.totalorder %s18, 1
    %p188 = por %p186, %p187
    %p189 = scmp.ne.s32.totalorder %s178, %s179
    %p190 = scmp.eq.s32.totalorder %s18, 0
    %p191 = por %p189, %p190
    %p192 = scmp.ne.s32.totalorder %s178, %s179
    %p193 = scmp.eq.s32.totalorder %s19, 1
    %p194 = por %p192, %p193
    %p196 = scmp.ne.s32.totalorder %s179, %s195
    %p197 = scmp.eq.s32.totalorder %s19, 0
    %p198 = por %p196, %p197
    %p199 = scmp.le.s32.totalorder 1, %s13
    %p200 = scmp.lt.s32.totalorder %s13, 3
    %p201 = pnand %p199, %p200
    %p202 = pneg %p201
    // Predicated region
    $region9: #{mlp_forward.1} parent=5 // pred_check
      _
    $region10: #{mlp_forward.1} parent=5 // pred_check_branch
      %204 = sbr.rel (%p201) target = $region12
    $region11: #{mlp_forward.1} parent=5 // pred_region
      %s205 = ssub.s32 %s13, 1
      // Predicated region
      $region13: #{mlp_forward.1} parent=11 // pred_check
        %p206 = pneg %p60
      $region14: #{mlp_forward.1} parent=11 // pred_check_branch
        %208 = sbr.rel (%p206) target = $region16
      $region15: #{mlp_forward.1} parent=11 // pred_region
        _
      $region16: #{mlp_forward.1} parent=11 // pred_fallthru
        _
      // Predicated region
      $region17: #{mlp_forward.1} parent=11 // pred_check
        %p209 = pneg %p81
      $region18: #{mlp_forward.1} parent=11 // pred_check_branch
        %211 = sbr.rel (%p209) target = $region20
      $region19: #{mlp_forward.1} parent=11 // pred_region
        _
      $region20: #{mlp_forward.1} parent=11 // pred_fallthru
        _
      // Predicated region
      $region21: #{mlp_forward.1} parent=11 // pred_check
        %p212 = pneg %p102
      $region22: #{mlp_forward.1} parent=11 // pred_check_branch
        %214 = sbr.rel (%p212) target = $region24
      $region23: #{mlp_forward.1} parent=11 // pred_region
        _
      $region24: #{mlp_forward.1} parent=11 // pred_fallthru
        _
      // Predicated region
      $region25: #{mlp_forward.1} parent=11 // pred_check
        %p215 = pneg %p123
      $region26: #{mlp_forward.1} parent=11 // pred_check_branch
        %217 = sbr.rel (%p215) target = $region28
      $region27: #{mlp_forward.1} parent=11 // pred_region
        _
      $region28: #{mlp_forward.1} parent=11 // pred_fallthru
        _
      // Predicated region
      $region29: #{mlp_forward.1} parent=11 // pred_check
        %p218 = pneg %p144
      $region30: #{mlp_forward.1} parent=11 // pred_check_branch
        %220 = sbr.rel (%p218) target = $region32
      $region31: #{mlp_forward.1} parent=11 // pred_region
        _
      $region32: #{mlp_forward.1} parent=11 // pred_fallthru
        _
      // Predicated region
      $region33: #{mlp_forward.1} parent=11 // pred_check
        %p221 = pneg %p165
      $region34: #{mlp_forward.1} parent=11 // pred_check_branch
        %223 = sbr.rel (%p221) target = $region36
      $region35: #{mlp_forward.1} parent=11 // pred_region
        _
      $region36: #{mlp_forward.1} parent=11 // pred_fallthru
        _
    $region12: #{mlp_forward.1} parent=5 // pred_fallthru
      _
    %p224 = scmp.lt.s32.totalorder %s13, 2
    // Predicated region
    $region37: #{mlp_forward.1} parent=5 // pred_check
      %p225 = pneg %p224
    $region38: #{mlp_forward.1} parent=5 // pred_check_branch
      %227 = sbr.rel (%p225) target = $region40
    $region39: #{mlp_forward.1} parent=5 // pred_region
      // Predicated region
      $region41: #{mlp_forward.1} parent=39 // pred_check
        %p228 = pneg %p33
      $region42: #{mlp_forward.1} parent=39 // pred_check_branch
        %230 = sbr.rel (%p228) target = $region44
      $region43: #{mlp_forward.1} parent=39 // pred_region
        %s231 = smul.u32 32, %s13
        %p232 = scmp.lt.s32.totalorder %s231, 63
        %s233 = scalar_select %p232, %s231, 63
        %s234 = smul.addr %s233, 8
        %s235 = scalar_lea.vmem %s0, %s234
        %s236 = smul.u32 32, %s13
      $region44: #{mlp_forward.1} parent=39 // pred_fallthru
        _
    $region40: #{mlp_forward.1} parent=5 // pred_fallthru
      _
    %p237 = scmp.le.s32.totalorder 1, %s13
    %p238 = scmp.lt.s32.totalorder %s13, 3
    %p239 = pnand %p237, %p238
    %p240 = pneg %p239
    // Predicated region
    $region45: #{mlp_forward.1} parent=5 // pred_check
      _
    $region46: #{mlp_forward.1} parent=5 // pred_check_branch
      %242 = sbr.rel (%p239) target = $region48
    $region47: #{mlp_forward.1} parent=5 // pred_region
      %s243 = ssub.s32 %s13, 1
      %s244 = smul.u32 32, %s18
      %p245 = scmp.lt.s32.totalorder %s244, 63
      %s246 = scalar_select %p245, %s244, 63
      %s247 = smul.addr %s246, 8
      %s248 = scalar_lea.vmem %s0, %s247
      %p249 = pneg %p39
      %p250 = pneg %p36
      %p251 = pneg %p60
      %p252 = pneg %p57
      %p253 = pneg %p81
      %p254 = pneg %p78
      %p255 = pneg %p102
      %p256 = pneg %p99
      %p257 = pneg %p123
      %p258 = pneg %p120
      %p259 = pneg %p144
      %p260 = pneg %p141
      %p261 = pneg %p165
      %p262 = pneg %p162
      %p263 = pneg %p191
      %p264 = pneg %p188
      %s265 = smul.u32 32, %s18
      %p266 = scmp.lt.s32.totalorder %s265, 63
      %s267 = scalar_select %p266, %s265, 63
      %s268 = smul.addr %s267, 4
      %s269 = scalar_lea.vmem %s7, %s268
      %s270 = smul.u32 32, %s18
      %p271 = scmp.lt.s32.totalorder %s270, 63
      %s272 = scalar_select %p271, %s270, 63
      %s273 = smul.addr %s272, 8
      %s274 = scalar_lea.vmem %s0, %s273
      %s275 = smul.u32 32, %s18
      %s276 = smul.u32 32, %s18
      %p277 = scmp.lt.s32.totalorder %s276, 63
      %s278 = scalar_select %p277, %s276, 63
      %s279 = smul.addr %s278, 4
      %s280 = scalar_lea.vmem %s7, %s279
      %s281 = smul.u32 32, %s18
      %v283 = vld [vmem:[%s274] sm:$0xff]
      %v284 = vld [vmem:[%s274 + $0x8] sm:$0xff]
      %v285 = vld [vmem:[%s274 + $0x10] sm:$0xff]
      %v286 = vld [vmem:[%s274 + $0x18] sm:$0xff]
      %v287 = vld [vmem:[%s274 + $0x20] sm:$0xff]
      %v288 = vld [vmem:[%s274 + $0x28] sm:$0xff]
      %v289 = vld [vmem:[%s274 + $0x30] sm:$0xff]
      %v290 = vld [vmem:[%s274 + $0x38] sm:$0xff]
      %v291 = vld [vmem:[%s274 + $0x40] sm:$0xff]
      %v292 = vld [vmem:[%s274 + $0x48] sm:$0xff]
      %v293 = vld [vmem:[%s274 + $0x50] sm:$0xff]
      %v294 = vld [vmem:[%s274 + $0x58] sm:$0xff]
      %v295 = vld [vmem:[%s274 + $0x60] sm:$0xff]
      %v296 = vld [vmem:[%s274 + $0x68] sm:$0xff]
      %v297 = vld [vmem:[%s274 + $0x70] sm:$0xff]
      %v298 = vld [vmem:[%s274 + $0x78] sm:$0xff]
      %v299 = vld [vmem:[%s274 + $0x80] sm:$0xff]
      %v300 = vld [vmem:[%s274 + $0x88] sm:$0xff]
      %v301 = vld [vmem:[%s274 + $0x90] sm:$0xff]
      %v302 = vld [vmem:[%s274 + $0x98] sm:$0xff]
      %v303 = vld [vmem:[%s274 + $0xa0] sm:$0xff]
      %v304 = vld [vmem:[%s274 + $0xa8] sm:$0xff]
      %v305 = vld [vmem:[%s274 + $0xb0] sm:$0xff]
      %v306 = vld [vmem:[%s274 + $0xb8] sm:$0xff]
      %v307 = vld [vmem:[%s274 + $0xc0] sm:$0xff]
      %v308 = vld [vmem:[%s274 + $0xc8] sm:$0xff]
      %v309 = vld [vmem:[%s274 + $0xd0] sm:$0xff]
      %v310 = vld [vmem:[%s274 + $0xd8] sm:$0xff]
      %v311 = vld [vmem:[%s274 + $0xe0] sm:$0xff]
      %v312 = vld [vmem:[%s274 + $0xe8] sm:$0xff]
      %v313 = vld [vmem:[%s274 + $0xf0] sm:$0xff]
      %v314 = vld [vmem:[%s274 + $0xf8] sm:$0xff]
      %v315 = vpack.c.bf16 %v284, %v283
      %v316 = vpack.c.bf16 %v286, %v285
      %v317 = vpack.c.bf16 %v288, %v287
      %v318 = vpack.c.bf16 %v290, %v289
      %v319 = vpack.c.bf16 %v292, %v291
      %v320 = vpack.c.bf16 %v294, %v293
      %v321 = vpack.c.bf16 %v296, %v295
      %v322 = vpack.c.bf16 %v298, %v297
      %v323 = vpack.c.bf16 %v300, %v299
      %v324 = vpack.c.bf16 %v302, %v301
      %v325 = vpack.c.bf16 %v304, %v303
      %v326 = vpack.c.bf16 %v306, %v305
      %v327 = vpack.c.bf16 %v308, %v307
      %v328 = vpack.c.bf16 %v310, %v309
      %v329 = vpack.c.bf16 %v312, %v311
      %v330 = vpack.c.bf16 %v314, %v313
      %v331 = vld [vmem:[%s1] sm:$0xf]
      %v332 = vld [vmem:[%s1 + $0x4] sm:$0xf]
      %v333 = vld [vmem:[%s2] sm:$0x1]
      %v335 = vlaneseq
      %v336 = vshrl.u32 %v335, 7
      %v337 = vsub.s32 0, %v336
      %v338 = vrot.slane %v333, %v337
      %v342 = vunpack.c.l.b16 %v331
      %v343 = vunpack.c.l.b16 %v332
      %v344 = vpack.c.b16 %v343, %v342
      %vm346 = vcmask 130048
      %v348 = vsel %vm346, %v315, 0
      %v351 = vsel %vm346, %v316, 0
      %v354 = vsel %vm346, %v317, 0
      %v357 = vsel %vm346, %v318, 0
      %v360 = vsel %vm346, %v319, 0
      %v363 = vsel %vm346, %v320, 0
      %v366 = vsel %vm346, %v321, 0
      %v369 = vsel %vm346, %v322, 0
      %v372 = vsel %vm346, %v323, 0
      %v375 = vsel %vm346, %v324, 0
      %v378 = vsel %vm346, %v325, 0
      %v381 = vsel %vm346, %v326, 0
      %v384 = vsel %vm346, %v327, 0
      %v387 = vsel %vm346, %v328, 0
      %v390 = vsel %vm346, %v329, 0
      %v393 = vsel %vm346, %v330, 0
      %395 = vmatprep.subr.bf16.mxu0 0
      %396 = vmatpush1.bf16.msra.mxu0 %v344
      %397 = vmatprep.subr.bf16.mxu0 0
      %398 = vmatpush1.bf16.msra.mxu0 0
      %399 = vmatprep.subr.bf16.mxu0 0
      %400 = vmatpush1.bf16.msra.mxu0 0
      %401 = vmatprep.subr.bf16.mxu0 0
      %402 = vmatpush1.bf16.msra.mxu0 0
      %403 = vmatprep.subr.bf16.mxu0 0
      %404 = vmatpush1.bf16.msra.mxu0 0
      %405 = vmatprep.subr.bf16.mxu0 0
      %406 = vmatpush1.bf16.msra.mxu0 0
      %407 = vmatprep.subr.bf16.mxu0 0
      %408 = vmatpush1.bf16.msra.mxu0 0
      %409 = vmatprep.subr.bf16.mxu0 0
      %410 = vmatpush1.bf16.msra.mxu0 0
      %411 = vmatprep.subr.bf16.mxu0 0
      %412 = vmatpush1.bf16.msra.mxu0 0
      %413 = vmatprep.subr.bf16.mxu0 0
      %414 = vmatpush1.bf16.msra.mxu0 0
      %415 = vmatprep.subr.bf16.mxu0 0
      %416 = vmatpush1.bf16.msra.mxu0 0
      %417 = vmatprep.subr.bf16.mxu0 0
      %418 = vmatpush1.bf16.msra.mxu0 0
      %419 = vmatprep.subr.bf16.mxu0 0
      %420 = vmatpush1.bf16.msra.mxu0 0
      %421 = vmatprep.subr.bf16.mxu0 0
      %422 = vmatpush1.bf16.msra.mxu0 0
      %423 = vmatprep.subr.bf16.mxu0 0
      %424 = vmatpush1.bf16.msra.mxu0 0
      %425 = vmatprep.subr.bf16.mxu0 0
      %426 = vmatpush1.bf16.msra.mxu0 0
      %427 = vmatprep.mubr.bf16.mxu0 0
      %428 = vmatmul.mubr.bf16.gmra.mrb[0].mxu0 %v348
      %v429 = vpop.f32.mrb[0].mxu0
      %v430 = vadd.f32 %v338, %v429
      %v431 = vpop.f32.mrb[0].mxu0
      %v432 = vpop.f32.mrb[0].mxu0
      %v433 = vadd.f32 %v338, %v432
      %v434 = vpop.f32.mrb[0].mxu0
      %435 = vmatprep.mubr.bf16.mxu0 0
      %436 = vmatmul.mubr.bf16.gmra.mrb[0].mxu0 %v351
      %v437 = vpop.f32.mrb[0].mxu0
      %v438 = vadd.f32 %v338, %v437
      %v439 = vpop.f32.mrb[0].mxu0
      %v440 = vpop.f32.mrb[0].mxu0
      %v441 = vadd.f32 %v338, %v440
      %v442 = vpop.f32.mrb[0].mxu0
      %443 = vmatprep.mubr.bf16.mxu0 0
      %444 = vmatmul.mubr.bf16.gmra.mrb[0].mxu0 %v354
      %v445 = vpop.f32.mrb[0].mxu0
      %v446 = vadd.f32 %v338, %v445
      %v447 = vpop.f32.mrb[0].mxu0
      %v448 = vpop.f32.mrb[0].mxu0
      %v449 = vadd.f32 %v338, %v448
      %v450 = vpop.f32.mrb[0].mxu0
      %451 = vmatprep.mubr.bf16.mxu0 0
      %452 = vmatmul.mubr.bf16.gmra.mrb[0].mxu0 %v357
      %v453 = vpop.f32.mrb[0].mxu0
      %v454 = vadd.f32 %v338, %v453
      %v455 = vpop.f32.mrb[0].mxu0
      %v456 = vpop.f32.mrb[0].mxu0
      %v457 = vadd.f32 %v338, %v456
      %v458 = vpop.f32.mrb[0].mxu0
      %459 = vmatprep.mubr.bf16.mxu0 0
      %460 = vmatmul.mubr.bf16.gmra.mrb[0].mxu0 %v360
      %v461 = vpop.f32.mrb[0].mxu0
      %v462 = vadd.f32 %v338, %v461
      %v463 = vpop.f32.mrb[0].mxu0
      %v464 = vpop.f32.mrb[0].mxu0
      %v465 = vadd.f32 %v338, %v464
      %v466 = vpop.f32.mrb[0].mxu0
      %467 = vmatprep.mubr.bf16.mxu0 0
      %468 = vmatmul.mubr.bf16.gmra.mrb[0].mxu0 %v363
      %v469 = vpop.f32.mrb[0].mxu0
      %v470 = vadd.f32 %v338, %v469
      %v471 = vpop.f32.mrb[0].mxu0
      %v472 = vpop.f32.mrb[0].mxu0
      %v473 = vadd.f32 %v338, %v472
      %v474 = vpop.f32.mrb[0].mxu0
      %475 = vmatprep.mubr.bf16.mxu0 0
      %476 = vmatmul.mubr.bf16.gmra.mrb[0].mxu0 %v366
      %v477 = vpop.f32.mrb[0].mxu0
      %v478 = vadd.f32 %v338, %v477
      %v479 = vpop.f32.mrb[0].mxu0
      %v480 = vpop.f32.mrb[0].mxu0
      %v481 = vadd.f32 %v338, %v480
      %v482 = vpop.f32.mrb[0].mxu0
      %483 = vmatprep.mubr.bf16.mxu0 0
      %484 = vmatmul.mubr.bf16.gmra.mrb[0].mxu0 %v369
      %v485 = vpop.f32.mrb[0].mxu0
      %v486 = vadd.f32 %v338, %v485
      %v487 = vpop.f32.mrb[0].mxu0
      %v488 = vpop.f32.mrb[0].mxu0
      %v489 = vadd.f32 %v338, %v488
      %v490 = vpop.f32.mrb[0].mxu0
      %491 = vmatprep.mubr.bf16.mxu0 0
      %492 = vmatmul.mubr.bf16.gmra.mrb[0].mxu0 %v372
      %v493 = vpop.f32.mrb[0].mxu0
      %v494 = vadd.f32 %v338, %v493
      %v495 = vpop.f32.mrb[0].mxu0
      %v496 = vpop.f32.mrb[0].mxu0
      %v497 = vadd.f32 %v338, %v496
      %v498 = vpop.f32.mrb[0].mxu0
      %499 = vmatprep.mubr.bf16.mxu0 0
      %500 = vmatmul.mubr.bf16.gmra.mrb[0].mxu0 %v375
      %v501 = vpop.f32.mrb[0].mxu0
      %v502 = vadd.f32 %v338, %v501
      %v503 = vpop.f32.mrb[0].mxu0
      %v504 = vpop.f32.mrb[0].mxu0
      %v505 = vadd.f32 %v338, %v504
      %v506 = vpop.f32.mrb[0].mxu0
      %507 = vmatprep.mubr.bf16.mxu0 0
      %508 = vmatmul.mubr.bf16.gmra.mrb[0].mxu0 %v378
      %v509 = vpop.f32.mrb[0].mxu0
      %v510 = vadd.f32 %v338, %v509
      %v511 = vpop.f32.mrb[0].mxu0
      %v512 = vpop.f32.mrb[0].mxu0
      %v513 = vadd.f32 %v338, %v512
      %v514 = vpop.f32.mrb[0].mxu0
      %515 = vmatprep.mubr.bf16.mxu0 0
      %516 = vmatmul.mubr.bf16.gmra.mrb[0].mxu0 %v381
      %v517 = vpop.f32.mrb[0].mxu0
      %v518 = vadd.f32 %v338, %v517
      %v519 = vpop.f32.mrb[0].mxu0
      %v520 = vpop.f32.mrb[0].mxu0
      %v521 = vadd.f32 %v338, %v520
      %v522 = vpop.f32.mrb[0].mxu0
      %523 = vmatprep.mubr.bf16.mxu0 0
      %524 = vmatmul.mubr.bf16.gmra.mrb[0].mxu0 %v384
      %v525 = vpop.f32.mrb[0].mxu0
      %v526 = vadd.f32 %v338, %v525
      %v527 = vpop.f32.mrb[0].mxu0
      %v528 = vpop.f32.mrb[0].mxu0
      %v529 = vadd.f32 %v338, %v528
      %v530 = vpop.f32.mrb[0].mxu0
      %531 = vmatprep.mubr.bf16.mxu0 0
      %532 = vmatmul.mubr.bf16.gmra.mrb[0].mxu0 %v387
      %v533 = vpop.f32.mrb[0].mxu0
      %v534 = vadd.f32 %v338, %v533
      %v535 = vpop.f32.mrb[0].mxu0
      %v536 = vpop.f32.mrb[0].mxu0
      %v537 = vadd.f32 %v338, %v536
      %v538 = vpop.f32.mrb[0].mxu0
      %539 = vmatprep.mubr.bf16.mxu0 0
      %540 = vmatmul.mubr.bf16.gmra.mrb[0].mxu0 %v390
      %v541 = vpop.f32.mrb[0].mxu0
      %v542 = vadd.f32 %v338, %v541
      %v543 = vpop.f32.mrb[0].mxu0
      %v544 = vpop.f32.mrb[0].mxu0
      %v545 = vadd.f32 %v338, %v544
      %v546 = vpop.f32.mrb[0].mxu0
      %547 = vmatprep.mubr.bf16.mxu0 0
      %548 = vmatmul.mubr.bf16.gmra.mrb[0].mxu0 %v393
      %v549 = vpop.f32.mrb[0].mxu0
      %v550 = vadd.f32 %v338, %v549
      %v551 = vpop.f32.mrb[0].mxu0
      %v552 = vpop.f32.mrb[0].mxu0
      %v553 = vadd.f32 %v338, %v552
      %v554 = vpop.f32.mrb[0].mxu0
      %555 = vdwg.mxu0
      %v556 = vmax.f32 %v430, 0.0
      %v557 = vmax.f32 %v433, 0.0
      %v558 = vmax.f32 %v438, 0.0
      %v559 = vmax.f32 %v441, 0.0
      %v560 = vmax.f32 %v446, 0.0
      %v561 = vmax.f32 %v449, 0.0
      %v562 = vmax.f32 %v454, 0.0
      %v563 = vmax.f32 %v457, 0.0
      %v564 = vmax.f32 %v462, 0.0
      %v565 = vmax.f32 %v465, 0.0
      %v566 = vmax.f32 %v470, 0.0
      %v567 = vmax.f32 %v473, 0.0
      %v568 = vmax.f32 %v478, 0.0
      %v569 = vmax.f32 %v481, 0.0
      %v570 = vmax.f32 %v486, 0.0
      %v571 = vmax.f32 %v489, 0.0
      %v572 = vmax.f32 %v494, 0.0
      %v573 = vmax.f32 %v497, 0.0
      %v574 = vmax.f32 %v502, 0.0
      %v575 = vmax.f32 %v505, 0.0
      %v576 = vmax.f32 %v510, 0.0
      %v577 = vmax.f32 %v513, 0.0
      %v578 = vmax.f32 %v518, 0.0
      %v579 = vmax.f32 %v521, 0.0
      %v580 = vmax.f32 %v526, 0.0
      %v581 = vmax.f32 %v529, 0.0
      %v582 = vmax.f32 %v534, 0.0
      %v583 = vmax.f32 %v537, 0.0
      %v584 = vmax.f32 %v542, 0.0
      %v585 = vmax.f32 %v545, 0.0
      %v586 = vmax.f32 %v550, 0.0
      %v587 = vmax.f32 %v553, 0.0
      %v588 = vpack.c.bf16 %v557, %v556
      %v589 = vpack.c.bf16 %v559, %v558
      %v590 = vpack.c.bf16 %v561, %v560
      %v591 = vpack.c.bf16 %v563, %v562
      %v592 = vpack.c.bf16 %v565, %v564
      %v593 = vpack.c.bf16 %v567, %v566
      %v594 = vpack.c.bf16 %v569, %v568
      %v595 = vpack.c.bf16 %v571, %v570
      %v596 = vpack.c.bf16 %v573, %v572
      %v597 = vpack.c.bf16 %v575, %v574
      %v598 = vpack.c.bf16 %v577, %v576
      %v599 = vpack.c.bf16 %v579, %v578
      %v600 = vpack.c.bf16 %v581, %v580
      %v601 = vpack.c.bf16 %v583, %v582
      %v602 = vpack.c.bf16 %v585, %v584
      %v603 = vpack.c.bf16 %v587, %v586
      %v604 = vld [vmem:[%s3] sm:$0xf]
      %v605 = vld [vmem:[%s3 + $0x4] sm:$0xf]
      %v606 = vld [vmem:[%s3 + $0x8] sm:$0xf]
      %v607 = vld [vmem:[%s3 + $0xc] sm:$0xf]
      %v608 = vld [vmem:[%s3 + $0x10] sm:$0xf]
      %v609 = vld [vmem:[%s3 + $0x14] sm:$0xf]
      %v610 = vld [vmem:[%s3 + $0x18] sm:$0xf]
      %v611 = vld [vmem:[%s3 + $0x1c] sm:$0xf]
      %v612 = vld [vmem:[%s3 + $0x20] sm:$0xf]
      %v613 = vld [vmem:[%s3 + $0x24] sm:$0xf]
      %v614 = vld [vmem:[%s3 + $0x28] sm:$0xf]
      %v615 = vld [vmem:[%s3 + $0x2c] sm:$0xf]
      %v616 = vld [vmem:[%s3 + $0x30] sm:$0xf]
      %v617 = vld [vmem:[%s3 + $0x34] sm:$0xf]
      %v618 = vld [vmem:[%s3 + $0x38] sm:$0xf]
      %v619 = vld [vmem:[%s3 + $0x3c] sm:$0xf]
      %v620 = vld [vmem:[%s4] sm:$0x1]
      %v622 = vlaneseq
      %v623 = vshrl.u32 %v622, 7
      %v624 = vsub.s32 0, %v623
      %v625 = vrot.slane %v620, %v624
      %v643 = vunpack.c.l.b16 %v604
      %v644 = vunpack.c.l.b16 %v605
      %v645 = vunpack.c.l.b16 %v606
      %v646 = vunpack.c.l.b16 %v607
      %v647 = vunpack.c.l.b16 %v608
      %v648 = vunpack.c.l.b16 %v609
      %v649 = vunpack.c.l.b16 %v610
      %v650 = vunpack.c.l.b16 %v611
      %v651 = vunpack.c.l.b16 %v612
      %v652 = vunpack.c.l.b16 %v613
      %v653 = vunpack.c.l.b16 %v614
      %v654 = vunpack.c.l.b16 %v615
      %v655 = vunpack.c.l.b16 %v616
      %v656 = vunpack.c.l.b16 %v617
      %v657 = vunpack.c.l.b16 %v618
      %v658 = vunpack.c.l.b16 %v619
      %v659 = vpack.c.b16 %v644, %v643
      %v660 = vpack.c.b16 %v646, %v645
      %v661 = vpack.c.b16 %v648, %v647
      %v662 = vpack.c.b16 %v650, %v649
      %v663 = vpack.c.b16 %v652, %v651
      %v664 = vpack.c.b16 %v654, %v653
      %v665 = vpack.c.b16 %v656, %v655
      %v666 = vpack.c.b16 %v658, %v657
      %675 = vmatprep.subr.bf16.mxu0 0
      %676 = vmatpush1.bf16.msra.mxu0 %v659
      %677 = vmatprep.subr.bf16.mxu0 0
      %678 = vmatpush1.bf16.msra.mxu0 %v660
      %679 = vmatprep.subr.bf16.mxu0 0
      %680 = vmatpush1.bf16.msra.mxu0 %v661
      %681 = vmatprep.subr.bf16.mxu0 0
      %682 = vmatpush1.bf16.msra.mxu0 %v662
      %683 = vmatprep.subr.bf16.mxu0 0
      %684 = vmatpush1.bf16.msra.mxu0 %v663
      %685 = vmatprep.subr.bf16.mxu0 0
      %686 = vmatpush1.bf16.msra.mxu0 %v664
      %687 = vmatprep.subr.bf16.mxu0 0
      %688 = vmatpush1.bf16.msra.mxu0 %v665
      %689 = vmatprep.subr.bf16.mxu0 0
      %690 = vmatpush1.bf16.msra.mxu0 %v666
      %691 = vmatprep.subr.bf16.mxu0 0
      %692 = vmatpush1.bf16.msra.mxu0 0
      %693 = vmatprep.subr.bf16.mxu0 0
      %694 = vmatpush1.bf16.msra.mxu0 0
      %695 = vmatprep.subr.bf16.mxu0 0
      %696 = vmatpush1.bf16.msra.mxu0 0
      %697 = vmatprep.subr.bf16.mxu0 0
      %698 = vmatpush1.bf16.msra.mxu0 0
      %699 = vmatprep.subr.bf16.mxu0 0
      %700 = vmatpush1.bf16.msra.mxu0 0
      %701 = vmatprep.subr.bf16.mxu0 0
      %702 = vmatpush1.bf16.msra.mxu0 0
      %703 = vmatprep.subr.bf16.mxu0 0
      %704 = vmatpush1.bf16.msra.mxu0 0
      %705 = vmatprep.subr.bf16.mxu0 0
      %706 = vmatpush1.bf16.msra.mxu0 0
      %707 = vmatprep.mubr.bf16.mxu0 0
      %708 = vmatmul.mubr.bf16.gmra.mrb[0].mxu0 %v588
      %v709 = vpop.f32.mrb[0].mxu0
      %v710 = vadd.f32 %v625, %v709
      %v711 = vpop.f32.mrb[0].mxu0
      %v712 = vpop.f32.mrb[0].mxu0
      %v713 = vadd.f32 %v625, %v712
      %v714 = vpop.f32.mrb[0].mxu0
      %715 = vmatprep.mubr.bf16.mxu0 0
      %716 = vmatmul.mubr.bf16.gmra.mrb[0].mxu0 %v589
      %v717 = vpop.f32.mrb[0].mxu0
      %v718 = vadd.f32 %v625, %v717
      %v719 = vpop.f32.mrb[0].mxu0
      %v720 = vpop.f32.mrb[0].mxu0
      %v721 = vadd.f32 %v625, %v720
      %v722 = vpop.f32.mrb[0].mxu0
      %723 = vmatprep.mubr.bf16.mxu0 0
      %724 = vmatmul.mubr.bf16.gmra.mrb[0].mxu0 %v590
      %v725 = vpop.f32.mrb[0].mxu0
      %v726 = vadd.f32 %v625, %v725
      %v727 = vpop.f32.mrb[0].mxu0
      %v728 = vpop.f32.mrb[0].mxu0
      %v729 = vadd.f32 %v625, %v728
      %v730 = vpop.f32.mrb[0].mxu0
      %731 = vmatprep.mubr.bf16.mxu0 0
      %732 = vmatmul.mubr.bf16.gmra.mrb[0].mxu0 %v591
      %v733 = vpop.f32.mrb[0].mxu0
      %v734 = vadd.f32 %v625, %v733
      %v735 = vpop.f32.mrb[0].mxu0
      %v736 = vpop.f32.mrb[0].mxu0
      %v737 = vadd.f32 %v625, %v736
      %v738 = vpop.f32.mrb[0].mxu0
      %739 = vmatprep.mubr.bf16.mxu0 0
      %740 = vmatmul.mubr.bf16.gmra.mrb[0].mxu0 %v592
      %v741 = vpop.f32.mrb[0].mxu0
      %v742 = vadd.f32 %v625, %v741
      %v743 = vpop.f32.mrb[0].mxu0
      %v744 = vpop.f32.mrb[0].mxu0
      %v745 = vadd.f32 %v625, %v744
      %v746 = vpop.f32.mrb[0].mxu0
      %747 = vmatprep.mubr.bf16.mxu0 0
      %748 = vmatmul.mubr.bf16.gmra.mrb[0].mxu0 %v593
      %v749 = vpop.f32.mrb[0].mxu0
      %v750 = vadd.f32 %v625, %v749
      %v751 = vpop.f32.mrb[0].mxu0
      %v752 = vpop.f32.mrb[0].mxu0
      %v753 = vadd.f32 %v625, %v752
      %v754 = vpop.f32.mrb[0].mxu0
      %755 = vmatprep.mubr.bf16.mxu0 0
      %756 = vmatmul.mubr.bf16.gmra.mrb[0].mxu0 %v594
      %v757 = vpop.f32.mrb[0].mxu0
      %v758 = vadd.f32 %v625, %v757
      %v759 = vpop.f32.mrb[0].mxu0
      %v760 = vpop.f32.mrb[0].mxu0
      %v761 = vadd.f32 %v625, %v760
      %v762 = vpop.f32.mrb[0].mxu0
      %763 = vmatprep.mubr.bf16.mxu0 0
      %764 = vmatmul.mubr.bf16.gmra.mrb[0].mxu0 %v595
      %v765 = vpop.f32.mrb[0].mxu0
      %v766 = vadd.f32 %v625, %v765
      %v767 = vpop.f32.mrb[0].mxu0
      %v768 = vpop.f32.mrb[0].mxu0
      %v769 = vadd.f32 %v625, %v768
      %v770 = vpop.f32.mrb[0].mxu0
      %771 = vmatprep.mubr.bf16.mxu0 0
      %772 = vmatmul.mubr.bf16.gmra.mrb[0].mxu0 %v596
      %v773 = vpop.f32.mrb[0].mxu0
      %v774 = vadd.f32 %v625, %v773
      %v775 = vpop.f32.mrb[0].mxu0
      %v776 = vpop.f32.mrb[0].mxu0
      %v777 = vadd.f32 %v625, %v776
      %v778 = vpop.f32.mrb[0].mxu0
      %779 = vmatprep.mubr.bf16.mxu0 0
      %780 = vmatmul.mubr.bf16.gmra.mrb[0].mxu0 %v597
      %v781 = vpop.f32.mrb[0].mxu0
      %v782 = vadd.f32 %v625, %v781
      %v783 = vpop.f32.mrb[0].mxu0
      %v784 = vpop.f32.mrb[0].mxu0
      %v785 = vadd.f32 %v625, %v784
      %v786 = vpop.f32.mrb[0].mxu0
      %787 = vmatprep.mubr.bf16.mxu0 0
      %788 = vmatmul.mubr.bf16.gmra.mrb[0].mxu0 %v598
      %v789 = vpop.f32.mrb[0].mxu0
      %v790 = vadd.f32 %v625, %v789
      %v791 = vpop.f32.mrb[0].mxu0
      %v792 = vpop.f32.mrb[0].mxu0
      %v793 = vadd.f32 %v625, %v792
      %v794 = vpop.f32.mrb[0].mxu0
      %795 = vmatprep.mubr.bf16.mxu0 0
      %796 = vmatmul.mubr.bf16.gmra.mrb[0].mxu0 %v599
      %v797 = vpop.f32.mrb[0].mxu0
      %v798 = vadd.f32 %v625, %v797
      %v799 = vpop.f32.mrb[0].mxu0
      %v800 = vpop.f32.mrb[0].mxu0
      %v801 = vadd.f32 %v625, %v800
      %v802 = vpop.f32.mrb[0].mxu0
      %803 = vmatprep.mubr.bf16.mxu0 0
      %804 = vmatmul.mubr.bf16.gmra.mrb[0].mxu0 %v600
      %v805 = vpop.f32.mrb[0].mxu0
      %v806 = vadd.f32 %v625, %v805
      %v807 = vpop.f32.mrb[0].mxu0
      %v808 = vpop.f32.mrb[0].mxu0
      %v809 = vadd.f32 %v625, %v808
      %v810 = vpop.f32.mrb[0].mxu0
      %811 = vmatprep.mubr.bf16.mxu0 0
      %812 = vmatmul.mubr.bf16.gmra.mrb[0].mxu0 %v601
      %v813 = vpop.f32.mrb[0].mxu0
      %v814 = vadd.f32 %v625, %v813
      %v815 = vpop.f32.mrb[0].mxu0
      %v816 = vpop.f32.mrb[0].mxu0
      %v817 = vadd.f32 %v625, %v816
      %v818 = vpop.f32.mrb[0].mxu0
      %819 = vmatprep.mubr.bf16.mxu0 0
      %820 = vmatmul.mubr.bf16.gmra.mrb[0].mxu0 %v602
      %v821 = vpop.f32.mrb[0].mxu0
      %v822 = vadd.f32 %v625, %v821
      %v823 = vpop.f32.mrb[0].mxu0
      %v824 = vpop.f32.mrb[0].mxu0
      %v825 = vadd.f32 %v625, %v824
      %v826 = vpop.f32.mrb[0].mxu0
      %827 = vmatprep.mubr.bf16.mxu0 0
      %828 = vmatmul.mubr.bf16.gmra.mrb[0].mxu0 %v603
      %v829 = vpop.f32.mrb[0].mxu0
      %v830 = vadd.f32 %v625, %v829
      %v831 = vpop.f32.mrb[0].mxu0
      %v832 = vpop.f32.mrb[0].mxu0
      %v833 = vadd.f32 %v625, %v832
      %v834 = vpop.f32.mrb[0].mxu0
      %835 = vdwg.mxu0
      %v836 = vmax.f32 %v710, 0.0
      %v837 = vmax.f32 %v713, 0.0
      %v838 = vmax.f32 %v718, 0.0
      %v839 = vmax.f32 %v721, 0.0
      %v840 = vmax.f32 %v726, 0.0
      %v841 = vmax.f32 %v729, 0.0
      %v842 = vmax.f32 %v734, 0.0
      %v843 = vmax.f32 %v737, 0.0
      %v844 = vmax.f32 %v742, 0.0
      %v845 = vmax.f32 %v745, 0.0
      %v846 = vmax.f32 %v750, 0.0
      %v847 = vmax.f32 %v753, 0.0
      %v848 = vmax.f32 %v758, 0.0
      %v849 = vmax.f32 %v761, 0.0
      %v850 = vmax.f32 %v766, 0.0
      %v851 = vmax.f32 %v769, 0.0
      %v852 = vmax.f32 %v774, 0.0
      %v853 = vmax.f32 %v777, 0.0
      %v854 = vmax.f32 %v782, 0.0
      %v855 = vmax.f32 %v785, 0.0
      %v856 = vmax.f32 %v790, 0.0
      %v857 = vmax.f32 %v793, 0.0
      %v858 = vmax.f32 %v798, 0.0
      %v859 = vmax.f32 %v801, 0.0
      %v860 = vmax.f32 %v806, 0.0
      %v861 = vmax.f32 %v809, 0.0
      %v862 = vmax.f32 %v814, 0.0
      %v863 = vmax.f32 %v817, 0.0
      %v864 = vmax.f32 %v822, 0.0
      %v865 = vmax.f32 %v825, 0.0
      %v866 = vmax.f32 %v830, 0.0
      %v867 = vmax.f32 %v833, 0.0
      %v868 = vpack.c.bf16 %v837, %v836
      %v869 = vpack.c.bf16 %v839, %v838
      %v870 = vpack.c.bf16 %v841, %v840
      %v871 = vpack.c.bf16 %v843, %v842
      %v872 = vpack.c.bf16 %v845, %v844
      %v873 = vpack.c.bf16 %v847, %v846
      %v874 = vpack.c.bf16 %v849, %v848
      %v875 = vpack.c.bf16 %v851, %v850
      %v876 = vpack.c.bf16 %v853, %v852
      %v877 = vpack.c.bf16 %v855, %v854
      %v878 = vpack.c.bf16 %v857, %v856
      %v879 = vpack.c.bf16 %v859, %v858
      %v880 = vpack.c.bf16 %v861, %v860
      %v881 = vpack.c.bf16 %v863, %v862
      %v882 = vpack.c.bf16 %v865, %v864
      %v883 = vpack.c.bf16 %v867, %v866
      %v884 = vld [vmem:[%s5] sm:$0xf]
      %v885 = vld [vmem:[%s5 + $0x4] sm:$0xf]
      %v886 = vld [vmem:[%s5 + $0x8] sm:$0xf]
      %v887 = vld [vmem:[%s5 + $0xc] sm:$0xf]
      %v888 = vld [vmem:[%s5 + $0x10] sm:$0xf]
      %v889 = vld [vmem:[%s5 + $0x14] sm:$0xf]
      %v890 = vld [vmem:[%s5 + $0x18] sm:$0xf]
      %v891 = vld [vmem:[%s5 + $0x1c] sm:$0xf]
      %v892 = vld [vmem:[%s5 + $0x20] sm:$0xf]
      %v893 = vld [vmem:[%s5 + $0x24] sm:$0xf]
      %v894 = vld [vmem:[%s5 + $0x28] sm:$0xf]
      %v895 = vld [vmem:[%s5 + $0x2c] sm:$0xf]
      %v896 = vld [vmem:[%s5 + $0x30] sm:$0xf]
      %v897 = vld [vmem:[%s5 + $0x34] sm:$0xf]
      %v898 = vld [vmem:[%s5 + $0x38] sm:$0xf]
      %v899 = vld [vmem:[%s5 + $0x3c] sm:$0xf]
      %v900 = vld [vmem:[%s6] sm:$0x1]
      %v902 = vlaneseq
      %v903 = vshrl.u32 %v902, 7
      %v904 = vsub.s32 0, %v903
      %v905 = vrot.slane %v900, %v904
      %v923 = vunpack.c.l.b16 %v884
      %v924 = vunpack.c.l.b16 %v885
      %v925 = vunpack.c.l.b16 %v886
      %v926 = vunpack.c.l.b16 %v887
      %v927 = vunpack.c.l.b16 %v888
      %v928 = vunpack.c.l.b16 %v889
      %v929 = vunpack.c.l.b16 %v890
      %v930 = vunpack.c.l.b16 %v891
      %v931 = vunpack.c.l.b16 %v892
      %v932 = vunpack.c.l.b16 %v893
      %v933 = vunpack.c.l.b16 %v894
      %v934 = vunpack.c.l.b16 %v895
      %v935 = vunpack.c.l.b16 %v896
      %v936 = vunpack.c.l.b16 %v897
      %v937 = vunpack.c.l.b16 %v898
      %v938 = vunpack.c.l.b16 %v899
      %v939 = vpack.c.b16 %v924, %v923
      %v940 = vpack.c.b16 %v926, %v925
      %v941 = vpack.c.b16 %v928, %v927
      %v942 = vpack.c.b16 %v930, %v929
      %v943 = vpack.c.b16 %v932, %v931
      %v944 = vpack.c.b16 %v934, %v933
      %v945 = vpack.c.b16 %v936, %v935
      %v946 = vpack.c.b16 %v938, %v937
      %955 = vmatprep.subr.bf16.mxu0 0
      %956 = vmatpush1.bf16.msra.mxu0 %v939
      %957 = vmatprep.subr.bf16.mxu0 0
      %958 = vmatpush1.bf16.msra.mxu0 %v940
      %959 = vmatprep.subr.bf16.mxu0 0
      %960 = vmatpush1.bf16.msra.mxu0 %v941
      %961 = vmatprep.subr.bf16.mxu0 0
      %962 = vmatpush1.bf16.msra.mxu0 %v942
      %963 = vmatprep.subr.bf16.mxu0 0
      %964 = vmatpush1.bf16.msra.mxu0 %v943
      %965 = vmatprep.subr.bf16.mxu0 0
      %966 = vmatpush1.bf16.msra.mxu0 %v944
      %967 = vmatprep.subr.bf16.mxu0 0
      %968 = vmatpush1.bf16.msra.mxu0 %v945
      %969 = vmatprep.subr.bf16.mxu0 0
      %970 = vmatpush1.bf16.msra.mxu0 %v946
      %971 = vmatprep.subr.bf16.mxu0 0
      %972 = vmatpush1.bf16.msra.mxu0 0
      %973 = vmatprep.subr.bf16.mxu0 0
      %974 = vmatpush1.bf16.msra.mxu0 0
      %975 = vmatprep.subr.bf16.mxu0 0
      %976 = vmatpush1.bf16.msra.mxu0 0
      %977 = vmatprep.subr.bf16.mxu0 0
      %978 = vmatpush1.bf16.msra.mxu0 0
      %979 = vmatprep.subr.bf16.mxu0 0
      %980 = vmatpush1.bf16.msra.mxu0 0
      %981 = vmatprep.subr.bf16.mxu0 0
      %982 = vmatpush1.bf16.msra.mxu0 0
      %983 = vmatprep.subr.bf16.mxu0 0
      %984 = vmatpush1.bf16.msra.mxu0 0
      %985 = vmatprep.subr.bf16.mxu0 0
      %986 = vmatpush1.bf16.msra.mxu0 0
      %987 = vmatprep.mubr.bf16.mxu0 0
      %988 = vmatmul.mubr.bf16.gmra.mrb[0].mxu0 %v868
      %v989 = vpop.f32.mrb[0].mxu0
      %v990 = vadd.f32 %v905, %v989
      %v991 = vpop.f32.mrb[0].mxu0
      %v992 = vpop.f32.mrb[0].mxu0
      %v993 = vadd.f32 %v905, %v992
      %v994 = vpop.f32.mrb[0].mxu0
      %995 = vmatprep.mubr.bf16.mxu0 0
      %996 = vmatmul.mubr.bf16.gmra.mrb[0].mxu0 %v869
      %v997 = vpop.f32.mrb[0].mxu0
      %v998 = vadd.f32 %v905, %v997
      %v999 = vpop.f32.mrb[0].mxu0
      %v1000 = vpop.f32.mrb[0].mxu0
      %v1001 = vadd.f32 %v905, %v1000
      %v1002 = vpop.f32.mrb[0].mxu0
      %1003 = vmatprep.mubr.bf16.mxu0 0
      %1004 = vmatmul.mubr.bf16.gmra.mrb[0].mxu0 %v870
      %v1005 = vpop.f32.mrb[0].mxu0
      %v1006 = vadd.f32 %v905, %v1005
      %v1007 = vpop.f32.mrb[0].mxu0
      %v1008 = vpop.f32.mrb[0].mxu0
      %v1009 = vadd.f32 %v905, %v1008
      %v1010 = vpop.f32.mrb[0].mxu0
      %1011 = vmatprep.mubr.bf16.mxu0 0
      %1012 = vmatmul.mubr.bf16.gmra.mrb[0].mxu0 %v871
      %v1013 = vpop.f32.mrb[0].mxu0
      %v1014 = vadd.f32 %v905, %v1013
      %v1015 = vpop.f32.mrb[0].mxu0
      %v1016 = vpop.f32.mrb[0].mxu0
      %v1017 = vadd.f32 %v905, %v1016
      %v1018 = vpop.f32.mrb[0].mxu0
      %1019 = vmatprep.mubr.bf16.mxu0 0
      %1020 = vmatmul.mubr.bf16.gmra.mrb[0].mxu0 %v872
      %v1021 = vpop.f32.mrb[0].mxu0
      %v1022 = vadd.f32 %v905, %v1021
      %v1023 = vpop.f32.mrb[0].mxu0
      %v1024 = vpop.f32.mrb[0].mxu0
      %v1025 = vadd.f32 %v905, %v1024
      %v1026 = vpop.f32.mrb[0].mxu0
      %1027 = vmatprep.mubr.bf16.mxu0 0
      %1028 = vmatmul.mubr.bf16.gmra.mrb[0].mxu0 %v873
      %v1029 = vpop.f32.mrb[0].mxu0
      %v1030 = vadd.f32 %v905, %v1029
      %v1031 = vpop.f32.mrb[0].mxu0
      %v1032 = vpop.f32.mrb[0].mxu0
      %v1033 = vadd.f32 %v905, %v1032
      %v1034 = vpop.f32.mrb[0].mxu0
      %1035 = vmatprep.mubr.bf16.mxu0 0
      %1036 = vmatmul.mubr.bf16.gmra.mrb[0].mxu0 %v874
      %v1037 = vpop.f32.mrb[0].mxu0
      %v1038 = vadd.f32 %v905, %v1037
      %v1039 = vpop.f32.mrb[0].mxu0
      %v1040 = vpop.f32.mrb[0].mxu0
      %v1041 = vadd.f32 %v905, %v1040
      %v1042 = vpop.f32.mrb[0].mxu0
      %1043 = vmatprep.mubr.bf16.mxu0 0
      %1044 = vmatmul.mubr.bf16.gmra.mrb[0].mxu0 %v875
      %v1045 = vpop.f32.mrb[0].mxu0
      %v1046 = vadd.f32 %v905, %v1045
      %v1047 = vpop.f32.mrb[0].mxu0
      %v1048 = vpop.f32.mrb[0].mxu0
      %v1049 = vadd.f32 %v905, %v1048
      %v1050 = vpop.f32.mrb[0].mxu0
      %1051 = vmatprep.mubr.bf16.mxu0 0
      %1052 = vmatmul.mubr.bf16.gmra.mrb[0].mxu0 %v876
      %v1053 = vpop.f32.mrb[0].mxu0
      %v1054 = vadd.f32 %v905, %v1053
      %v1055 = vpop.f32.mrb[0].mxu0
      %v1056 = vpop.f32.mrb[0].mxu0
      %v1057 = vadd.f32 %v905, %v1056
      %v1058 = vpop.f32.mrb[0].mxu0
      %1059 = vmatprep.mubr.bf16.mxu0 0
      %1060 = vmatmul.mubr.bf16.gmra.mrb[0].mxu0 %v877
      %v1061 = vpop.f32.mrb[0].mxu0
      %v1062 = vadd.f32 %v905, %v1061
      %v1063 = vpop.f32.mrb[0].mxu0
      %v1064 = vpop.f32.mrb[0].mxu0
      %v1065 = vadd.f32 %v905, %v1064
      %v1066 = vpop.f32.mrb[0].mxu0
      %1067 = vmatprep.mubr.bf16.mxu0 0
      %1068 = vmatmul.mubr.bf16.gmra.mrb[0].mxu0 %v878
      %v1069 = vpop.f32.mrb[0].mxu0
      %v1070 = vadd.f32 %v905, %v1069
      %v1071 = vpop.f32.mrb[0].mxu0
      %v1072 = vpop.f32.mrb[0].mxu0
      %v1073 = vadd.f32 %v905, %v1072
      %v1074 = vpop.f32.mrb[0].mxu0
      %1075 = vmatprep.mubr.bf16.mxu0 0
      %1076 = vmatmul.mubr.bf16.gmra.mrb[0].mxu0 %v879
      %v1077 = vpop.f32.mrb[0].mxu0
      %v1078 = vadd.f32 %v905, %v1077
      %v1079 = vpop.f32.mrb[0].mxu0
      %v1080 = vpop.f32.mrb[0].mxu0
      %v1081 = vadd.f32 %v905, %v1080
      %v1082 = vpop.f32.mrb[0].mxu0
      %1083 = vmatprep.mubr.bf16.mxu0 0
      %1084 = vmatmul.mubr.bf16.gmra.mrb[0].mxu0 %v880
      %v1085 = vpop.f32.mrb[0].mxu0
      %v1086 = vadd.f32 %v905, %v1085
      %v1087 = vpop.f32.mrb[0].mxu0
      %v1088 = vpop.f32.mrb[0].mxu0
      %v1089 = vadd.f32 %v905, %v1088
      %v1090 = vpop.f32.mrb[0].mxu0
      %1091 = vmatprep.mubr.bf16.mxu0 0
      %1092 = vmatmul.mubr.bf16.gmra.mrb[0].mxu0 %v881
      %v1093 = vpop.f32.mrb[0].mxu0
      %v1094 = vadd.f32 %v905, %v1093
      %v1095 = vpop.f32.mrb[0].mxu0
      %v1096 = vpop.f32.mrb[0].mxu0
      %v1097 = vadd.f32 %v905, %v1096
      %v1098 = vpop.f32.mrb[0].mxu0
      %1099 = vmatprep.mubr.bf16.mxu0 0
      %1100 = vmatmul.mubr.bf16.gmra.mrb[0].mxu0 %v882
      %v1101 = vpop.f32.mrb[0].mxu0
      %v1102 = vadd.f32 %v905, %v1101
      %v1103 = vpop.f32.mrb[0].mxu0
      %v1104 = vpop.f32.mrb[0].mxu0
      %v1105 = vadd.f32 %v905, %v1104
      %v1106 = vpop.f32.mrb[0].mxu0
      %1107 = vmatprep.mubr.bf16.mxu0 0
      %1108 = vmatmul.mubr.bf16.gmra.mrb[0].mxu0 %v883
      %v1109 = vpop.f32.mrb[0].mxu0
      %v1110 = vadd.f32 %v905, %v1109
      %v1111 = vpop.f32.mrb[0].mxu0
      %v1112 = vpop.f32.mrb[0].mxu0
      %v1113 = vadd.f32 %v905, %v1112
      %v1114 = vpop.f32.mrb[0].mxu0
      %1115 = vdwg.mxu0
      %1116 = vmax.xlane.f32.xlu0 %v990
      %v1117 = vpop.xlane.xlu0 %1116
      %1118 = vmax.xlane.f32.xlu0 %v993
      %v1119 = vpop.xlane.xlu0 %1118
      %1120 = vmax.xlane.f32.xlu0 %v998
      %v1121 = vpop.xlane.xlu0 %1120
      %1122 = vmax.xlane.f32.xlu0 %v1001
      %v1123 = vpop.xlane.xlu0 %1122
      %1124 = vmax.xlane.f32.xlu0 %v1006
      %v1125 = vpop.xlane.xlu0 %1124
      %1126 = vmax.xlane.f32.xlu0 %v1009
      %v1127 = vpop.xlane.xlu0 %1126
      %1128 = vmax.xlane.f32.xlu0 %v1014
      %v1129 = vpop.xlane.xlu0 %1128
      %1130 = vmax.xlane.f32.xlu0 %v1017
      %v1131 = vpop.xlane.xlu0 %1130
      %1132 = vmax.xlane.f32.xlu0 %v1022
      %v1133 = vpop.xlane.xlu0 %1132
      %1134 = vmax.xlane.f32.xlu0 %v1025
      %v1135 = vpop.xlane.xlu0 %1134
      %1136 = vmax.xlane.f32.xlu0 %v1030
      %v1137 = vpop.xlane.xlu0 %1136
      %1138 = vmax.xlane.f32.xlu0 %v1033
      %v1139 = vpop.xlane.xlu0 %1138
      %1140 = vmax.xlane.f32.xlu0 %v1038
      %v1141 = vpop.xlane.xlu0 %1140
      %1142 = vmax.xlane.f32.xlu0 %v1041
      %v1143 = vpop.xlane.xlu0 %1142
      %1144 = vmax.xlane.f32.xlu0 %v1046
      %v1145 = vpop.xlane.xlu0 %1144
      %1146 = vmax.xlane.f32.xlu0 %v1049
      %v1147 = vpop.xlane.xlu0 %1146
      %1148 = vmax.xlane.f32.xlu0 %v1054
      %v1149 = vpop.xlane.xlu0 %1148
      %1150 = vmax.xlane.f32.xlu0 %v1057
      %v1151 = vpop.xlane.xlu0 %1150
      %1152 = vmax.xlane.f32.xlu0 %v1062
      %v1153 = vpop.xlane.xlu0 %1152
      %1154 = vmax.xlane.f32.xlu0 %v1065
      %v1155 = vpop.xlane.xlu0 %1154
      %1156 = vmax.xlane.f32.xlu0 %v1070
      %v1157 = vpop.xlane.xlu0 %1156
      %1158 = vmax.xlane.f32.xlu0 %v1073
      %v1159 = vpop.xlane.xlu0 %1158
      %1160 = vmax.xlane.f32.xlu0 %v1078
      %v1161 = vpop.xlane.xlu0 %1160
      %1162 = vmax.xlane.f32.xlu0 %v1081
      %v1163 = vpop.xlane.xlu0 %1162
      %1164 = vmax.xlane.f32.xlu0 %v1086
      %v1165 = vpop.xlane.xlu0 %1164
      %1166 = vmax.xlane.f32.xlu0 %v1089
      %v1167 = vpop.xlane.xlu0 %1166
      %1168 = vmax.xlane.f32.xlu0 %v1094
      %v1169 = vpop.xlane.xlu0 %1168
      %1170 = vmax.xlane.f32.xlu0 %v1097
      %v1171 = vpop.xlane.xlu0 %1170
      %1172 = vmax.xlane.f32.xlu0 %v1102
      %v1173 = vpop.xlane.xlu0 %1172
      %1174 = vmax.xlane.f32.xlu0 %v1105
      %v1175 = vpop.xlane.xlu0 %1174
      %1176 = vmax.xlane.f32.xlu0 %v1110
      %v1177 = vpop.xlane.xlu0 %1176
      %1178 = vmax.xlane.f32.xlu0 %v1113
      %v1179 = vpop.xlane.xlu0 %1178
      %v1180 = vsub.f32 %v990, %v1117
      %v1181 = vsub.f32 %v993, %v1119
      %v1182 = vsub.f32 %v998, %v1121
      %v1183 = vsub.f32 %v1001, %v1123
      %v1184 = vsub.f32 %v1006, %v1125
      %v1185 = vsub.f32 %v1009, %v1127
      %v1186 = vsub.f32 %v1014, %v1129
      %v1187 = vsub.f32 %v1017, %v1131
      %v1188 = vsub.f32 %v1022, %v1133
      %v1189 = vsub.f32 %v1025, %v1135
      %v1190 = vsub.f32 %v1030, %v1137
      %v1191 = vsub.f32 %v1033, %v1139
      %v1192 = vsub.f32 %v1038, %v1141
      %v1193 = vsub.f32 %v1041, %v1143
      %v1194 = vsub.f32 %v1046, %v1145
      %v1195 = vsub.f32 %v1049, %v1147
      %v1196 = vsub.f32 %v1054, %v1149
      %v1197 = vsub.f32 %v1057, %v1151
      %v1198 = vsub.f32 %v1062, %v1153
      %v1199 = vsub.f32 %v1065, %v1155
      %v1200 = vsub.f32 %v1070, %v1157
      %v1201 = vsub.f32 %v1073, %v1159
      %v1202 = vsub.f32 %v1078, %v1161
      %v1203 = vsub.f32 %v1081, %v1163
      %v1204 = vsub.f32 %v1086, %v1165
      %v1205 = vsub.f32 %v1089, %v1167
      %v1206 = vsub.f32 %v1094, %v1169
      %v1207 = vsub.f32 %v1097, %v1171
      %v1208 = vsub.f32 %v1102, %v1173
      %v1209 = vsub.f32 %v1105, %v1175
      %v1210 = vsub.f32 %v1110, %v1177
      %v1211 = vsub.f32 %v1113, %v1179
      %v1212 = vmul.f32 %v1180, 1.442695
      %v1213 = vpow.pop %v1212
      %v1214 = vmul.f32 %v1181, 1.442695
      %v1215 = vpow.pop %v1214
      %v1216 = vmul.f32 %v1182, 1.442695
      %v1217 = vpow.pop %v1216
      %v1218 = vmul.f32 %v1183, 1.442695
      %v1219 = vpow.pop %v1218
      %v1220 = vmul.f32 %v1184, 1.442695
      %v1221 = vpow.pop %v1220
      %v1222 = vmul.f32 %v1185, 1.442695
      %v1223 = vpow.pop %v1222
      %v1224 = vmul.f32 %v1186, 1.442695
      %v1225 = vpow.pop %v1224
      %v1226 = vmul.f32 %v1187, 1.442695
      %v1227 = vpow.pop %v1226
      %v1228 = vmul.f32 %v1188, 1.442695
      %v1229 = vpow.pop %v1228
      %v1230 = vmul.f32 %v1189, 1.442695
      %v1231 = vpow.pop %v1230
      %v1232 = vmul.f32 %v1190, 1.442695
      %v1233 = vpow.pop %v1232
      %v1234 = vmul.f32 %v1191, 1.442695
      %v1235 = vpow.pop %v1234
      %v1236 = vmul.f32 %v1192, 1.442695
      %v1237 = vpow.pop %v1236
      %v1238 = vmul.f32 %v1193, 1.442695
      %v1239 = vpow.pop %v1238
      %v1240 = vmul.f32 %v1194, 1.442695
      %v1241 = vpow.pop %v1240
      %v1242 = vmul.f32 %v1195, 1.442695
      %v1243 = vpow.pop %v1242
      %v1244 = vmul.f32 %v1196, 1.442695
      %v1245 = vpow.pop %v1244
      %v1246 = vmul.f32 %v1197, 1.442695
      %v1247 = vpow.pop %v1246
      %v1248 = vmul.f32 %v1198, 1.442695
      %v1249 = vpow.pop %v1248
      %v1250 = vmul.f32 %v1199, 1.442695
      %v1251 = vpow.pop %v1250
      %v1252 = vmul.f32 %v1200, 1.442695
      %v1253 = vpow.pop %v1252
      %v1254 = vmul.f32 %v1201, 1.442695
      %v1255 = vpow.pop %v1254
      %v1256 = vmul.f32 %v1202, 1.442695
      %v1257 = vpow.pop %v1256
      %v1258 = vmul.f32 %v1203, 1.442695
      %v1259 = vpow.pop %v1258
      %v1260 = vmul.f32 %v1204, 1.442695
      %v1261 = vpow.pop %v1260
      %v1262 = vmul.f32 %v1205, 1.442695
      %v1263 = vpow.pop %v1262
      %v1264 = vmul.f32 %v1206, 1.442695
      %v1265 = vpow.pop %v1264
      %v1266 = vmul.f32 %v1207, 1.442695
      %v1267 = vpow.pop %v1266
      %v1268 = vmul.f32 %v1208, 1.442695
      %v1269 = vpow.pop %v1268
      %v1270 = vmul.f32 %v1209, 1.442695
      %v1271 = vpow.pop %v1270
      %v1272 = vmul.f32 %v1210, 1.442695
      %v1273 = vpow.pop %v1272
      %v1274 = vmul.f32 %v1211, 1.442695
      %v1275 = vpow.pop %v1274
      %1276 = vadd.xlane.f32.xlu0 %v1213
      %v1277 = vpop.xlane.xlu0 %1276
      %1278 = vadd.xlane.f32.xlu0 %v1215
      %v1279 = vpop.xlane.xlu0 %1278
      %1280 = vadd.xlane.f32.xlu0 %v1217
      %v1281 = vpop.xlane.xlu0 %1280
      %1282 = vadd.xlane.f32.xlu0 %v1219
      %v1283 = vpop.xlane.xlu0 %1282
      %1284 = vadd.xlane.f32.xlu0 %v1221
      %v1285 = vpop.xlane.xlu0 %1284
      %1286 = vadd.xlane.f32.xlu0 %v1223
      %v1287 = vpop.xlane.xlu0 %1286
      %1288 = vadd.xlane.f32.xlu0 %v1225
      %v1289 = vpop.xlane.xlu0 %1288
      %1290 = vadd.xlane.f32.xlu0 %v1227
      %v1291 = vpop.xlane.xlu0 %1290
      %1292 = vadd.xlane.f32.xlu0 %v1229
      %v1293 = vpop.xlane.xlu0 %1292
      %1294 = vadd.xlane.f32.xlu0 %v1231
      %v1295 = vpop.xlane.xlu0 %1294
      %1296 = vadd.xlane.f32.xlu0 %v1233
      %v1297 = vpop.xlane.xlu0 %1296
      %1298 = vadd.xlane.f32.xlu0 %v1235
      %v1299 = vpop.xlane.xlu0 %1298
      %1300 = vadd.xlane.f32.xlu0 %v1237
      %v1301 = vpop.xlane.xlu0 %1300
      %1302 = vadd.xlane.f32.xlu0 %v1239
      %v1303 = vpop.xlane.xlu0 %1302
      %1304 = vadd.xlane.f32.xlu0 %v1241
      %v1305 = vpop.xlane.xlu0 %1304
      %1306 = vadd.xlane.f32.xlu0 %v1243
      %v1307 = vpop.xlane.xlu0 %1306
      %1308 = vadd.xlane.f32.xlu0 %v1245
      %v1309 = vpop.xlane.xlu0 %1308
      %1310 = vadd.xlane.f32.xlu0 %v1247
      %v1311 = vpop.xlane.xlu0 %1310
      %1312 = vadd.xlane.f32.xlu0 %v1249
      %v1313 = vpop.xlane.xlu0 %1312
      %1314 = vadd.xlane.f32.xlu0 %v1251
      %v1315 = vpop.xlane.xlu0 %1314
      %1316 = vadd.xlane.f32.xlu0 %v1253
      %v1317 = vpop.xlane.xlu0 %1316
      %1318 = vadd.xlane.f32.xlu0 %v1255
      %v1319 = vpop.xlane.xlu0 %1318
      %1320 = vadd.xlane.f32.xlu0 %v1257
      %v1321 = vpop.xlane.xlu0 %1320
      %1322 = vadd.xlane.f32.xlu0 %v1259
      %v1323 = vpop.xlane.xlu0 %1322
      %1324 = vadd.xlane.f32.xlu0 %v1261
      %v1325 = vpop.xlane.xlu0 %1324
      %1326 = vadd.xlane.f32.xlu0 %v1263
      %v1327 = vpop.xlane.xlu0 %1326
      %1328 = vadd.xlane.f32.xlu0 %v1265
      %v1329 = vpop.xlane.xlu0 %1328
      %1330 = vadd.xlane.f32.xlu0 %v1267
      %v1331 = vpop.xlane.xlu0 %1330
      %1332 = vadd.xlane.f32.xlu0 %v1269
      %v1333 = vpop.xlane.xlu0 %1332
      %1334 = vadd.xlane.f32.xlu0 %v1271
      %v1335 = vpop.xlane.xlu0 %1334
      %1336 = vadd.xlane.f32.xlu0 %v1273
      %v1337 = vpop.xlane.xlu0 %1336
      %1338 = vadd.xlane.f32.xlu0 %v1275
      %v1339 = vpop.xlane.xlu0 %1338
      %v1340 = vlog2.pop %v1277
      %v1341 = vmul.f32 %v1340, 0.6931472
      %v1342 = vlog2.pop %v1279
      %v1343 = vmul.f32 %v1342, 0.6931472
      %v1344 = vlog2.pop %v1281
      %v1345 = vmul.f32 %v1344, 0.6931472
      %v1346 = vlog2.pop %v1283
      %v1347 = vmul.f32 %v1346, 0.6931472
      %v1348 = vlog2.pop %v1285
      %v1349 = vmul.f32 %v1348, 0.6931472
      %v1350 = vlog2.pop %v1287
      %v1351 = vmul.f32 %v1350, 0.6931472
      %v1352 = vlog2.pop %v1289
      %v1353 = vmul.f32 %v1352, 0.6931472
      %v1354 = vlog2.pop %v1291
      %v1355 = vmul.f32 %v1354, 0.6931472
      %v1356 = vlog2.pop %v1293
      %v1357 = vmul.f32 %v1356, 0.6931472
      %v1358 = vlog2.pop %v1295
      %v1359 = vmul.f32 %v1358, 0.6931472
      %v1360 = vlog2.pop %v1297
      %v1361 = vmul.f32 %v1360, 0.6931472
      %v1362 = vlog2.pop %v1299
      %v1363 = vmul.f32 %v1362, 0.6931472
      %v1364 = vlog2.pop %v1301
      %v1365 = vmul.f32 %v1364, 0.6931472
      %v1366 = vlog2.pop %v1303
      %v1367 = vmul.f32 %v1366, 0.6931472
      %v1368 = vlog2.pop %v1305
      %v1369 = vmul.f32 %v1368, 0.6931472
      %v1370 = vlog2.pop %v1307
      %v1371 = vmul.f32 %v1370, 0.6931472
      %v1372 = vlog2.pop %v1309
      %v1373 = vmul.f32 %v1372, 0.6931472
      %v1374 = vlog2.pop %v1311
      %v1375 = vmul.f32 %v1374, 0.6931472
      %v1376 = vlog2.pop %v1313
      %v1377 = vmul.f32 %v1376, 0.6931472
      %v1378 = vlog2.pop %v1315
      %v1379 = vmul.f32 %v1378, 0.6931472
      %v1380 = vlog2.pop %v1317
      %v1381 = vmul.f32 %v1380, 0.6931472
      %v1382 = vlog2.pop %v1319
      %v1383 = vmul.f32 %v1382, 0.6931472
      %v1384 = vlog2.pop %v1321
      %v1385 = vmul.f32 %v1384, 0.6931472
      %v1386 = vlog2.pop %v1323
      %v1387 = vmul.f32 %v1386, 0.6931472
      %v1388 = vlog2.pop %v1325
      %v1389 = vmul.f32 %v1388, 0.6931472
      %v1390 = vlog2.pop %v1327
      %v1391 = vmul.f32 %v1390, 0.6931472
      %v1392 = vlog2.pop %v1329
      %v1393 = vmul.f32 %v1392, 0.6931472
      %v1394 = vlog2.pop %v1331
      %v1395 = vmul.f32 %v1394, 0.6931472
      %v1396 = vlog2.pop %v1333
      %v1397 = vmul.f32 %v1396, 0.6931472
      %v1398 = vlog2.pop %v1335
      %v1399 = vmul.f32 %v1398, 0.6931472
      %v1400 = vlog2.pop %v1337
      %v1401 = vmul.f32 %v1400, 0.6931472
      %v1402 = vlog2.pop %v1339
      %v1403 = vmul.f32 %v1402, 0.6931472
      %v1404 = vsub.f32 %v1180, %v1341
      %v1405 = vsub.f32 %v1181, %v1343
      %v1406 = vsub.f32 %v1182, %v1345
      %v1407 = vsub.f32 %v1183, %v1347
      %v1408 = vsub.f32 %v1184, %v1349
      %v1409 = vsub.f32 %v1185, %v1351
      %v1410 = vsub.f32 %v1186, %v1353
      %v1411 = vsub.f32 %v1187, %v1355
      %v1412 = vsub.f32 %v1188, %v1357
      %v1413 = vsub.f32 %v1189, %v1359
      %v1414 = vsub.f32 %v1190, %v1361
      %v1415 = vsub.f32 %v1191, %v1363
      %v1416 = vsub.f32 %v1192, %v1365
      %v1417 = vsub.f32 %v1193, %v1367
      %v1418 = vsub.f32 %v1194, %v1369
      %v1419 = vsub.f32 %v1195, %v1371
      %v1420 = vsub.f32 %v1196, %v1373
      %v1421 = vsub.f32 %v1197, %v1375
      %v1422 = vsub.f32 %v1198, %v1377
      %v1423 = vsub.f32 %v1199, %v1379
      %v1424 = vsub.f32 %v1200, %v1381
      %v1425 = vsub.f32 %v1201, %v1383
      %v1426 = vsub.f32 %v1202, %v1385
      %v1427 = vsub.f32 %v1203, %v1387
      %v1428 = vsub.f32 %v1204, %v1389
      %v1429 = vsub.f32 %v1205, %v1391
      %v1430 = vsub.f32 %v1206, %v1393
      %v1431 = vsub.f32 %v1207, %v1395
      %v1432 = vsub.f32 %v1208, %v1397
      %v1433 = vsub.f32 %v1209, %v1399
      %v1434 = vsub.f32 %v1210, %v1401
      %v1435 = vsub.f32 %v1211, %v1403
      %v1436 = vpack.c.bf16 %v1405, %v1404
      %v1437 = vpack.c.bf16 %v1407, %v1406
      %v1438 = vpack.c.bf16 %v1409, %v1408
      %v1439 = vpack.c.bf16 %v1411, %v1410
      %v1440 = vpack.c.bf16 %v1413, %v1412
      %v1441 = vpack.c.bf16 %v1415, %v1414
      %v1442 = vpack.c.bf16 %v1417, %v1416
      %v1443 = vpack.c.bf16 %v1419, %v1418
      %v1444 = vpack.c.bf16 %v1421, %v1420
      %v1445 = vpack.c.bf16 %v1423, %v1422
      %v1446 = vpack.c.bf16 %v1425, %v1424
      %v1447 = vpack.c.bf16 %v1427, %v1426
      %v1448 = vpack.c.bf16 %v1429, %v1428
      %v1449 = vpack.c.bf16 %v1431, %v1430
      %v1450 = vpack.c.bf16 %v1433, %v1432
      %v1451 = vpack.c.bf16 %v1435, %v1434
      %v1468 = vunpack.c.l.b16 %v1436
      %v1469 = vunpack.c.h.b16 %v1436
      %v1470 = vunpack.c.l.b16 %v1437
      %v1471 = vunpack.c.h.b16 %v1437
      %v1472 = vunpack.c.l.b16 %v1438
      %v1473 = vunpack.c.h.b16 %v1438
      %v1474 = vunpack.c.l.b16 %v1439
      %v1475 = vunpack.c.h.b16 %v1439
      %v1476 = vunpack.c.l.b16 %v1440
      %v1477 = vunpack.c.h.b16 %v1440
      %v1478 = vunpack.c.l.b16 %v1441
      %v1479 = vunpack.c.h.b16 %v1441
      %v1480 = vunpack.c.l.b16 %v1442
      %v1481 = vunpack.c.h.b16 %v1442
      %v1482 = vunpack.c.l.b16 %v1443
      %v1483 = vunpack.c.h.b16 %v1443
      %v1484 = vunpack.c.l.b16 %v1444
      %v1485 = vunpack.c.h.b16 %v1444
      %v1486 = vunpack.c.l.b16 %v1445
      %v1487 = vunpack.c.h.b16 %v1445
      %v1488 = vunpack.c.l.b16 %v1446
      %v1489 = vunpack.c.h.b16 %v1446
      %v1490 = vunpack.c.l.b16 %v1447
      %v1491 = vunpack.c.h.b16 %v1447
      %v1492 = vunpack.c.l.b16 %v1448
      %v1493 = vunpack.c.h.b16 %v1448
      %v1494 = vunpack.c.l.b16 %v1449
      %v1495 = vunpack.c.h.b16 %v1449
      %v1496 = vunpack.c.l.b16 %v1450
      %v1497 = vunpack.c.h.b16 %v1450
      %v1498 = vunpack.c.l.b16 %v1451
      %v1499 = vunpack.c.h.b16 %v1451
      %v1500 = vpack.c.b16 %v1468, %v1468
      %v1501 = vpack.c.b16 %v1469, %v1469
      %v1502 = vpack.c.b16 %v1470, %v1470
      %v1503 = vpack.c.b16 %v1471, %v1471
      %v1504 = vpack.c.b16 %v1472, %v1472
      %v1505 = vpack.c.b16 %v1473, %v1473
      %v1506 = vpack.c.b16 %v1474, %v1474
      %v1507 = vpack.c.b16 %v1475, %v1475
      %v1508 = vpack.c.b16 %v1476, %v1476
      %v1509 = vpack.c.b16 %v1477, %v1477
      %v1510 = vpack.c.b16 %v1478, %v1478
      %v1511 = vpack.c.b16 %v1479, %v1479
      %v1512 = vpack.c.b16 %v1480, %v1480
      %v1513 = vpack.c.b16 %v1481, %v1481
      %v1514 = vpack.c.b16 %v1482, %v1482
      %v1515 = vpack.c.b16 %v1483, %v1483
      %v1516 = vpack.c.b16 %v1484, %v1484
      %v1517 = vpack.c.b16 %v1485, %v1485
      %v1518 = vpack.c.b16 %v1486, %v1486
      %v1519 = vpack.c.b16 %v1487, %v1487
      %v1520 = vpack.c.b16 %v1488, %v1488
      %v1521 = vpack.c.b16 %v1489, %v1489
      %v1522 = vpack.c.b16 %v1490, %v1490
      %v1523 = vpack.c.b16 %v1491, %v1491
      %v1524 = vpack.c.b16 %v1492, %v1492
      %v1525 = vpack.c.b16 %v1493, %v1493
      %v1526 = vpack.c.b16 %v1494, %v1494
      %v1527 = vpack.c.b16 %v1495, %v1495
      %v1528 = vpack.c.b16 %v1496, %v1496
      %v1529 = vpack.c.b16 %v1497, %v1497
      %v1530 = vpack.c.b16 %v1498, %v1498
      %v1531 = vpack.c.b16 %v1499, %v1499
      %1564 = vst [vmem:[%s280] sm:$0xf] %v1500
      %1565 = vst [vmem:[%s280 + $0x4] sm:$0xf] %v1501
      %1566 = vst [vmem:[%s280 + $0x8] sm:$0xf] %v1502
      %1567 = vst [vmem:[%s280 + $0xc] sm:$0xf] %v1503
      %1568 = vst [vmem:[%s280 + $0x10] sm:$0xf] %v1504
      %1569 = vst [vmem:[%s280 + $0x14] sm:$0xf] %v1505
      %1570 = vst [vmem:[%s280 + $0x18] sm:$0xf] %v1506
      %1571 = vst [vmem:[%s280 + $0x1c] sm:$0xf] %v1507
      %1572 = vst [vmem:[%s280 + $0x20] sm:$0xf] %v1508
      %1573 = vst [vmem:[%s280 + $0x24] sm:$0xf] %v1509
      %1574 = vst [vmem:[%s280 + $0x28] sm:$0xf] %v1510
      %1575 = vst [vmem:[%s280 + $0x2c] sm:$0xf] %v1511
      %1576 = vst [vmem:[%s280 + $0x30] sm:$0xf] %v1512
      %1577 = vst [vmem:[%s280 + $0x34] sm:$0xf] %v1513
      %1578 = vst [vmem:[%s280 + $0x38] sm:$0xf] %v1514
      %1579 = vst [vmem:[%s280 + $0x3c] sm:$0xf] %v1515
      %1580 = vst [vmem:[%s280 + $0x40] sm:$0xf] %v1516
      %1581 = vst [vmem:[%s280 + $0x44] sm:$0xf] %v1517
      %1582 = vst [vmem:[%s280 + $0x48] sm:$0xf] %v1518
      %1583 = vst [vmem:[%s280 + $0x4c] sm:$0xf] %v1519
      %1584 = vst [vmem:[%s280 + $0x50] sm:$0xf] %v1520
      %1585 = vst [vmem:[%s280 + $0x54] sm:$0xf] %v1521
      %1586 = vst [vmem:[%s280 + $0x58] sm:$0xf] %v1522
      %1587 = vst [vmem:[%s280 + $0x5c] sm:$0xf] %v1523
      %1588 = vst [vmem:[%s280 + $0x60] sm:$0xf] %v1524
      %1589 = vst [vmem:[%s280 + $0x64] sm:$0xf] %v1525
      %1590 = vst [vmem:[%s280 + $0x68] sm:$0xf] %v1526
      %1591 = vst [vmem:[%s280 + $0x6c] sm:$0xf] %v1527
      %1592 = vst [vmem:[%s280 + $0x70] sm:$0xf] %v1528
      %1593 = vst [vmem:[%s280 + $0x74] sm:$0xf] %v1529
      %1594 = vst [vmem:[%s280 + $0x78] sm:$0xf] %v1530
      %1595 = vst [vmem:[%s280 + $0x7c] sm:$0xf] %v1531
      %s1596 = smul.u32 32, %s18
      %p1597 = scmp.lt.s32.totalorder %s1596, 63
      %s1598 = scalar_select %p1597, %s1596, 63
      %s1599 = smul.addr %s1598, 4
      %s1600 = scalar_lea.vmem %s7, %s1599
      // Predicated region
      $region49: #{mlp_forward.1} parent=47 // pred_check
        %p1601 = pneg %p188
      $region50: #{mlp_forward.1} parent=47 // pred_check_branch
        %1603 = sbr.rel (%p1601) target = $region52
      $region51: #{mlp_forward.1} parent=47 // pred_region
        %s1604 = smul.u32 32, %s18
      $region52: #{mlp_forward.1} parent=47 // pred_fallthru
        _
    $region48: #{mlp_forward.1} parent=5 // pred_fallthru
      _
    %p1605 = scmp.le.s32.totalorder 2, %s13
    // Predicated region
    $region53: #{mlp_forward.1} parent=5 // pred_check
      %p1606 = pneg %p1605
    $region54: #{mlp_forward.1} parent=5 // pred_check_branch
      %1608 = sbr.rel (%p1606) target = $region56
    $region55: #{mlp_forward.1} parent=5 // pred_region
      %s1609 = ssub.s32 %s13, 2
      // Predicated region
      $region57: #{mlp_forward.1} parent=55 // pred_check
        %p1610 = pneg %p194
      $region58: #{mlp_forward.1} parent=55 // pred_check_branch
        %1612 = sbr.rel (%p1610) target = $region60
      $region59: #{mlp_forward.1} parent=55 // pred_region
        %s1613 = smul.u32 32, %s19
        %p1614 = scmp.lt.s32.totalorder %s1613, 63
        %s1615 = scalar_select %p1614, %s1613, 63
        %s1616 = smul.addr %s1615, 4
        %s1617 = scalar_lea.vmem %s7, %s1616
      $region60: #{mlp_forward.1} parent=55 // pred_fallthru
        _
    $region56: #{mlp_forward.1} parent=5 // pred_fallthru
      _
  $region6: #{mlp_forward.1} parent=0 // loop_footer
    %s17 = sadd.s32 1, %s13
  $region7: #{mlp_forward.1} parent=0 // loop_footer_branch
    %12 = sbr.rel target = $region3
  $region8: #{mlp_forward.1} parent=0 // loop_exit
    _

</llo_original>
